<compile_context>
chip_gen: v7x
topology: tpu7x:2x2x1
jax: 0.10.0
libtpu: 0.0.40
codegen_flags: <defaults>
</compile_context>

<pallas_src>
import functools
import math
from typing import NamedTuple

import jax
import jax.numpy as jnp
from jax.experimental import pallas as pl
from jax.experimental.pallas import tpu as pltpu

# Older jax releases expose TPUCompilerParams instead of CompilerParams.
_CompilerParams = getattr(pltpu, "CompilerParams", None) or getattr(
    pltpu, "TPUCompilerParams")


def _round_up(x, m):
    return (x + m - 1) // m * m


def _vmem_cap_bytes():
    """~75% of physical VMEM (keeps one code path safe on v5e/v6e/v7x)."""
    try:
        return int(pltpu.get_tpu_info().vmem_capacity_bytes) * 3 // 4
    except Exception:
        return 56 * 1024 * 1024


_VMEM_CAP = _vmem_cap_bytes()


def _pick_tm(m, cap=512):
    """M tile: whole-M block for small problems; otherwise >= 2 parallel
    tiles (v7x megacore occupancy), sublane(8)-aligned, at most `cap`."""
    if m <= 32:
        return m                     # block dim == full dim is always legal
    return min(cap, _round_up((m + 1) // 2, 8))


# ---------------------------------------------------------------------------
# Pallas kernel: one-shot (x @ w) + bias (+ LeakyReLU) per M tile.
# Full K and full N live in one block -> no reduction axis, no scratch;
# weight/bias index maps are constant -> resident in VMEM across the grid.
# ---------------------------------------------------------------------------
def _gemm_bias_act_kernel(x_ref, w_ref, b_ref, o_ref, *, alpha):
    acc = jnp.dot(x_ref[...], w_ref[...], preferred_element_type=jnp.float32)
    acc = acc + b_ref[...]                       # (1, N) broadcast over rows
    if alpha is not None:                        # fused LeakyReLU
        acc = jnp.where(acc >= 0.0, acc, alpha * acc)
    o_ref[...] = acc.astype(o_ref.dtype)


def _pallas_conv_gemm(x2d, w2d, b2d, alpha, out_dtype):
    """x2d: (M, K) bf16 patches/activations; w2d: (K, N) bf16; b2d: (1, N) f32."""
    M, K = x2d.shape
    Kw, N = w2d.shape
    assert K == Kw, (K, Kw)

    TM = _pick_tm(M)
    grid_m = -(-M // TM)

    out_itemsize = jnp.dtype(out_dtype).itemsize
    # Double-buffered x/out tiles + (conservatively double-counted) resident weight.
    vmem_need = 2 * (TM * K * 2 + TM * N * out_itemsize) + 2 * (K * N * 2) + N * 4
    vmem_limit = int(min(max(2 * vmem_need, 32 * 1024 * 1024), _VMEM_CAP))

    return pl.pallas_call(
        functools.partial(_gemm_bias_act_kernel, alpha=alpha),
        out_shape=jax.ShapeDtypeStruct((M, N), out_dtype),
        grid=(grid_m,),
        in_specs=[
            pl.BlockSpec((TM, K), lambda i: (i, 0)),
            pl.BlockSpec((K, N), lambda i: (0, 0)),    # resident weight
            pl.BlockSpec((1, N), lambda i: (0, 0)),    # resident bias
        ],
        out_specs=pl.BlockSpec((TM, N), lambda i: (i, 0)),
        compiler_params=_CompilerParams(
            dimension_semantics=("parallel",),
            vmem_limit_bytes=vmem_limit),
    )(x2d.astype(jnp.bfloat16), w2d, b2d)


# ---------------------------------------------------------------------------
# Conv2d (PyTorch semantics) = NHWC im2col (plain-JAX glue) + Pallas GEMM
# ---------------------------------------------------------------------------
class ConvCfg(NamedTuple):
    c_in: int
    c_out: int
    ksize: int
    stride: int
    pad: int


def _im2col(x_nhwc, ksize, stride, pad):
    B, H, W, C = x_nhwc.shape
    Hout = (H + 2 * pad - ksize) // stride + 1
    Wout = (W + 2 * pad - ksize) // stride + 1
    if pad:
        x_nhwc = jnp.pad(x_nhwc, ((0, 0), (pad, pad), (pad, pad), (0, 0)))
    cols = []
    for ky in range(ksize):
        for kx in range(ksize):
            cols.append(x_nhwc[:, ky:ky + stride * Hout:stride,
                               kx:kx + stride * Wout:stride, :])
    patches = jnp.concatenate(cols, axis=-1)     # (B,Ho,Wo,K*K*C), (ky,kx,ci) order
    return patches.reshape(B * Hout * Wout, ksize * ksize * C), Hout, Wout


def conv2d_nhwc(x, layer, cfg, alpha, out_dtype):
    B = x.shape[0]
    if (cfg.stride == 1 and cfg.pad == 0
            and cfg.ksize == x.shape[1] and cfg.ksize == x.shape[2]):
        # Full-spatial conv (the `cls` head): im2col is a free reshape.
        patches = x.reshape(B, cfg.ksize * cfg.ksize * cfg.c_in)
        Hout = Wout = 1
    else:
        patches, Hout, Wout = _im2col(x, cfg.ksize, cfg.stride, cfg.pad)
    out2d = _pallas_conv_gemm(patches, layer["w2d"], layer["b2d"], alpha, out_dtype)
    return out2d.reshape(B, Hout, Wout, cfg.c_out)


def _prep_conv(w_oihw, b):
    """PyTorch-layout (Cout, Cin, K, K) weight -> GEMM layout, once at init."""
    c_out, c_in, ks, _ = w_oihw.shape
    # (Cout,Cin,ky,kx) -> (ky,kx,Cin,Cout) -> (K*K*Cin, Cout): matches im2col order.
    w2d = jnp.transpose(w_oihw, (2, 3, 1, 0)).reshape(ks * ks * c_in, c_out)
    return {"w2d": w2d.astype(jnp.bfloat16),
            "b2d": b.astype(jnp.float32).reshape(1, c_out)}


# ---------------------------------------------------------------------------
# Discriminator
# ---------------------------------------------------------------------------
def build_discriminator(channels=3, num_domains=5, image_size=32, conv_dim=64):
    assert image_size % 16 == 0
    cfgs = {
        "conv1": ConvCfg(channels, conv_dim, 4, 2, 1),
        "conv2": ConvCfg(conv_dim, conv_dim * 2, 4, 2, 1),
        "conv3": ConvCfg(conv_dim * 2, conv_dim * 4, 4, 2, 1),
        "conv4": ConvCfg(conv_dim * 4, conv_dim * 8, 4, 2, 1),
        "gan": ConvCfg(conv_dim * 8, 1, 3, 1, 1),
        "cls": ConvCfg(conv_dim * 8, num_domains, image_size // 16, 1, 0),
    }

    def init(key):
        params = {}
        keys = jax.random.split(key, len(cfgs))
        for k, (name, cfg) in zip(keys, cfgs.items()):
            kw, kb = jax.random.split(k)
            # Matches the PyTorch module: weight ~ N(0, 0.02); bias keeps the
            # default nn.Conv2d uniform init (normal_ only touches .weight).
            w = 0.02 * jax.random.normal(
                kw, (cfg.c_out, cfg.c_in, cfg.ksize, cfg.ksize), jnp.float32)
            bound = 1.0 / math.sqrt(cfg.c_in * cfg.ksize * cfg.ksize)
            b = jax.random.uniform(kb, (cfg.c_out,), jnp.float32, -bound, bound)
            params[name] = _prep_conv(w, b)
        return params

    @jax.jit
    def forward(params, x_nchw):
        alpha = 0.01
        # NCHW -> NHWC once at the boundary; bf16 activations between layers.
        x = jnp.transpose(x_nchw, (0, 2, 3, 1)).astype(jnp.bfloat16)
        x = conv2d_nhwc(x, params["conv1"], cfgs["conv1"], alpha, jnp.bfloat16)
        x = conv2d_nhwc(x, params["conv2"], cfgs["conv2"], alpha, jnp.bfloat16)
        x = conv2d_nhwc(x, params["conv3"], cfgs["conv3"], alpha, jnp.bfloat16)
        x = conv2d_nhwc(x, params["conv4"], cfgs["conv4"], alpha, jnp.bfloat16)
        # Heads share the conv4 feature map; cls needs no patch copy at all.
        gan = conv2d_nhwc(x, params["gan"], cfgs["gan"], None, jnp.float32)
        cls = conv2d_nhwc(x, params["cls"], cfgs["cls"], None, jnp.float32)
        gan_nchw = jnp.transpose(gan, (0, 3, 1, 2))
        cls_nchw = jnp.transpose(cls, (0, 3, 1, 2))
        # NOTE: like PyTorch's .squeeze(), this also drops the batch dim when B == 1.
        return gan_nchw, jnp.squeeze(cls_nchw)

    return init, forward


if __name__ == "__main__":
    # Small, self-consistent configuration (image_size must be divisible by 16).
    batch, channels, image_size = 2, 4, 16
    num_domains, conv_dim = 5, 8

    init, forward = build_discriminator(channels, num_domains, image_size, conv_dim)

    key = jax.random.PRNGKey(0)
    k_params, k_x = jax.random.split(key)
    params = init(k_params)
    x = jax.random.normal(k_x, (batch, channels, image_size, image_size), jnp.float32)

    gan_out, cls_out = forward(params, x)
    jax.block_until_ready((gan_out, cls_out))

    assert gan_out.shape == (batch, 1, image_size // 16, image_size // 16), gan_out.shape
    assert cls_out.shape == (batch, num_domains), cls_out.shape
    assert bool(jnp.isfinite(gan_out).all()) and bool(jnp.isfinite(cls_out).all())
    print("KERNEL_OK")
</pallas_src>

<mosaic_0001>
module attributes {stable_mosaic.version = 11 : i64} {
  func.func @_gemm_bias_act_kernel(%arg0: i32, %arg1: memref<64x64xbf16, #tpu.memory_space<vmem>>, %arg2: memref<64x8xbf16, #tpu.memory_space<vmem>>, %arg3: memref<1x8xf32, #tpu.memory_space<vmem>>, %arg4: memref<64x8xbf16, #tpu.memory_space<vmem>>) attributes {dimension_semantics = [#tpu.dimension_semantics<parallel>], iteration_bounds = array<i64: 2>, scalar_prefetch = 0 : i64, scratch_operands = 0 : i64, tpu.core_type = #tpu.core_type<tc>, window_params = [{transform_indices = @transform_0, window_bounds = array<i64: 64, 64>}, {pipeline_mode = #tpu.pipeline_mode<synchronous>, transform_indices = @transform_1, window_bounds = array<i64: 64, 8>}, {pipeline_mode = #tpu.pipeline_mode<synchronous>, transform_indices = @transform_2, window_bounds = array<i64: 1, 8>}, {transform_indices = @transform_3, window_bounds = array<i64: 64, 8>}]} {
    %c0 = arith.constant 0 : index
    %c0_0 = arith.constant 0 : index
    %0 = vector.load %arg1[%c0, %c0_0] : memref<64x64xbf16, #tpu.memory_space<vmem>>, vector<64x64xbf16>
    %c0_1 = arith.constant 0 : index
    %c0_2 = arith.constant 0 : index
    %1 = vector.load %arg2[%c0_1, %c0_2] : memref<64x8xbf16, #tpu.memory_space<vmem>>, vector<64x8xbf16>
    %cst = arith.constant dense<0.000000e+00> : vector<64x8xf32>
    %2 = tpu.matmul %0, %1, %cst {dimension_numbers = #tpu.dot_dimension_numbers<[1], [0], [0], [1], [0, 0, 1, 1], [], []>} : vector<64x64xbf16>, vector<64x8xbf16>, vector<64x8xf32> -> vector<64x8xf32>
    %c0_3 = arith.constant 0 : index
    %c0_4 = arith.constant 0 : index
    %3 = vector.load %arg3[%c0_3, %c0_4] : memref<1x8xf32, #tpu.memory_space<vmem>>, vector<1x8xf32>
    %4 = vector.broadcast %3 : vector<1x8xf32> to vector<64x8xf32>
    %5 = arith.addf %2, %4 : vector<64x8xf32>
    %cst_5 = arith.constant 0.000000e+00 : f32
    %6 = vector.broadcast %cst_5 : f32 to vector<64x8xf32>
    %7 = arith.cmpf oge, %5, %6 : vector<64x8xf32>
    %cst_6 = arith.constant 0.00999999977 : f32
    %8 = vector.broadcast %cst_6 : f32 to vector<64x8xf32>
    %9 = arith.mulf %8, %5 : vector<64x8xf32>
    %10 = arith.select %7, %5, %9 : vector<64x8xi1>, vector<64x8xf32>
    %11 = arith.truncf %10 : vector<64x8xf32> to vector<64x8xbf16>
    %c0_7 = arith.constant 0 : index
    %c0_8 = arith.constant 0 : index
    %12 = vector.load %arg4[%c0_7, %c0_8] : memref<64x8xbf16, #tpu.memory_space<vmem>>, vector<64x8xbf16>
    tpu.vector_store %arg4[%c0_7, %c0_8], %11 {strides = array<i32>} : memref<64x8xbf16, #tpu.memory_space<vmem>>, vector<64x8xbf16>,
    return
  }
  func.func @transform_0(%arg0: i32) -> (i32, i32) {
    %c0_i32 = arith.constant 0 : i32
    %c0_i32_0 = arith.constant 0 : i32
    return %arg0, %c0_i32 : i32, i32
  }
  func.func @transform_1(%arg0: i32) -> (i32, i32) {
    %c0_i32 = arith.constant 0 : i32
    %c0_i32_0 = arith.constant 0 : i32
    %c0_i32_1 = arith.constant 0 : i32
    return %c0_i32, %c0_i32_0 : i32, i32
  }
  func.func @transform_2(%arg0: i32) -> (i32, i32) {
    %c0_i32 = arith.constant 0 : i32
    %c0_i32_0 = arith.constant 0 : i32
    %c0_i32_1 = arith.constant 0 : i32
    return %c0_i32, %c0_i32_0 : i32, i32
  }
  func.func @transform_3(%arg0: i32) -> (i32, i32) {
    %c0_i32 = arith.constant 0 : i32
    %c0_i32_0 = arith.constant 0 : i32
    return %arg0, %c0_i32 : i32, i32
  }
}

module attributes {stable_mosaic.version = 11 : i64} {
  func.func @_gemm_bias_act_kernel(%arg0: i32, %arg1: memref<32x128xbf16, #tpu.memory_space<vmem>>, %arg2: memref<128x16xbf16, #tpu.memory_space<vmem>>, %arg3: memref<1x16xf32, #tpu.memory_space<vmem>>, %arg4: memref<32x16xbf16, #tpu.memory_space<vmem>>) attributes {dimension_semantics = [#tpu.dimension_semantics<parallel>], iteration_bounds = array<i64: 1>, scalar_prefetch = 0 : i64, scratch_operands = 0 : i64, tpu.core_type = #tpu.core_type<tc>, window_params = [{transform_indices = @transform_0, window_bounds = array<i64: 32, 128>}, {pipeline_mode = #tpu.pipeline_mode<synchronous>, transform_indices = @transform_1, window_bounds = array<i64: 128, 16>}, {pipeline_mode = #tpu.pipeline_mode<synchronous>, transform_indices = @transform_2, window_bounds = array<i64: 1, 16>}, {transform_indices = @transform_3, window_bounds = array<i64: 32, 16>}]} {
    %c0 = arith.constant 0 : index
    %c0_0 = arith.constant 0 : index
    %0 = vector.load %arg1[%c0, %c0_0] : memref<32x128xbf16, #tpu.memory_space<vmem>>, vector<32x128xbf16>
    %c0_1 = arith.constant 0 : index
    %c0_2 = arith.constant 0 : index
    %1 = vector.load %arg2[%c0_1, %c0_2] : memref<128x16xbf16, #tpu.memory_space<vmem>>, vector<128x16xbf16>
    %cst = arith.constant dense<0.000000e+00> : vector<32x16xf32>
    %2 = tpu.matmul %0, %1, %cst {dimension_numbers = #tpu.dot_dimension_numbers<[1], [0], [0], [1], [0, 0, 1, 1], [], []>} : vector<32x128xbf16>, vector<128x16xbf16>, vector<32x16xf32> -> vector<32x16xf32>
    %c0_3 = arith.constant 0 : index
    %c0_4 = arith.constant 0 : index
    %3 = vector.load %arg3[%c0_3, %c0_4] : memref<1x16xf32, #tpu.memory_space<vmem>>, vector<1x16xf32>
    %4 = vector.broadcast %3 : vector<1x16xf32> to vector<32x16xf32>
    %5 = arith.addf %2, %4 : vector<32x16xf32>
    %cst_5 = arith.constant 0.000000e+00 : f32
    %6 = vector.broadcast %cst_5 : f32 to vector<32x16xf32>
    %7 = arith.cmpf oge, %5, %6 : vector<32x16xf32>
    %cst_6 = arith.constant 0.00999999977 : f32
    %8 = vector.broadcast %cst_6 : f32 to vector<32x16xf32>
    %9 = arith.mulf %8, %5 : vector<32x16xf32>
    %10 = arith.select %7, %5, %9 : vector<32x16xi1>, vector<32x16xf32>
    %11 = arith.truncf %10 : vector<32x16xf32> to vector<32x16xbf16>
    %c0_7 = arith.constant 0 : index
    %c0_8 = arith.constant 0 : index
    %12 = vector.load %arg4[%c0_7, %c0_8] : memref<32x16xbf16, #tpu.memory_space<vmem>>, vector<32x16xbf16>
    tpu.vector_store %arg4[%c0_7, %c0_8], %11 {strides = array<i32>} : memref<32x16xbf16, #tpu.memory_space<vmem>>, vector<32x16xbf16>,
    return
  }
  func.func @transform_0(%arg0: i32) -> (i32, i32) {
    %c0_i32 = arith.constant 0 : i32
    %c0_i32_0 = arith.constant 0 : i32
    return %arg0, %c0_i32 : i32, i32
  }
  func.func @transform_1(%arg0: i32) -> (i32, i32) {
    %c0_i32 = arith.constant 0 : i32
    %c0_i32_0 = arith.constant 0 : i32
    %c0_i32_1 = arith.constant 0 : i32
    return %c0_i32, %c0_i32_0 : i32, i32
  }
  func.func @transform_2(%arg0: i32) -> (i32, i32) {
    %c0_i32 = arith.constant 0 : i32
    %c0_i32_0 = arith.constant 0 : i32
    %c0_i32_1 = arith.constant 0 : i32
    return %c0_i32, %c0_i32_0 : i32, i32
  }
  func.func @transform_3(%arg0: i32) -> (i32, i32) {
    %c0_i32 = arith.constant 0 : i32
    %c0_i32_0 = arith.constant 0 : i32
    return %arg0, %c0_i32 : i32, i32
  }
}

module attributes {stable_mosaic.version = 11 : i64} {
  func.func @_gemm_bias_act_kernel(%arg0: i32, %arg1: memref<8x256xbf16, #tpu.memory_space<vmem>>, %arg2: memref<256x32xbf16, #tpu.memory_space<vmem>>, %arg3: memref<1x32xf32, #tpu.memory_space<vmem>>, %arg4: memref<8x32xbf16, #tpu.memory_space<vmem>>) attributes {dimension_semantics = [#tpu.dimension_semantics<parallel>], iteration_bounds = array<i64: 1>, scalar_prefetch = 0 : i64, scratch_operands = 0 : i64, tpu.core_type = #tpu.core_type<tc>, window_params = [{transform_indices = @transform_0, window_bounds = array<i64: 8, 256>}, {pipeline_mode = #tpu.pipeline_mode<synchronous>, transform_indices = @transform_1, window_bounds = array<i64: 256, 32>}, {pipeline_mode = #tpu.pipeline_mode<synchronous>, transform_indices = @transform_2, window_bounds = array<i64: 1, 32>}, {transform_indices = @transform_3, window_bounds = array<i64: 8, 32>}]} {
    %c0 = arith.constant 0 : index
    %c0_0 = arith.constant 0 : index
    %0 = vector.load %arg1[%c0, %c0_0] : memref<8x256xbf16, #tpu.memory_space<vmem>>, vector<8x256xbf16>
    %c0_1 = arith.constant 0 : index
    %c0_2 = arith.constant 0 : index
    %1 = vector.load %arg2[%c0_1, %c0_2] : memref<256x32xbf16, #tpu.memory_space<vmem>>, vector<256x32xbf16>
    %cst = arith.constant dense<0.000000e+00> : vector<8x32xf32>
    %2 = tpu.matmul %0, %1, %cst {dimension_numbers = #tpu.dot_dimension_numbers<[1], [0], [0], [1], [0, 0, 1, 1], [], []>} : vector<8x256xbf16>, vector<256x32xbf16>, vector<8x32xf32> -> vector<8x32xf32>
    %c0_3 = arith.constant 0 : index
    %c0_4 = arith.constant 0 : index
    %3 = vector.load %arg3[%c0_3, %c0_4] : memref<1x32xf32, #tpu.memory_space<vmem>>, vector<1x32xf32>
    %4 = vector.broadcast %3 : vector<1x32xf32> to vector<8x32xf32>
    %5 = arith.addf %2, %4 : vector<8x32xf32>
    %cst_5 = arith.constant 0.000000e+00 : f32
    %6 = vector.broadcast %cst_5 : f32 to vector<8x32xf32>
    %7 = arith.cmpf oge, %5, %6 : vector<8x32xf32>
    %cst_6 = arith.constant 0.00999999977 : f32
    %8 = vector.broadcast %cst_6 : f32 to vector<8x32xf32>
    %9 = arith.mulf %8, %5 : vector<8x32xf32>
    %10 = arith.select %7, %5, %9 : vector<8x32xi1>, vector<8x32xf32>
    %11 = arith.truncf %10 : vector<8x32xf32> to vector<8x32xbf16>
    %c0_7 = arith.constant 0 : index
    %c0_8 = arith.constant 0 : index
    %12 = vector.load %arg4[%c0_7, %c0_8] : memref<8x32xbf16, #tpu.memory_space<vmem>>, vector<8x32xbf16>
    tpu.vector_store %arg4[%c0_7, %c0_8], %11 {strides = array<i32>} : memref<8x32xbf16, #tpu.memory_space<vmem>>, vector<8x32xbf16>,
    return
  }
  func.func @transform_0(%arg0: i32) -> (i32, i32) {
    %c0_i32 = arith.constant 0 : i32
    %c0_i32_0 = arith.constant 0 : i32
    return %arg0, %c0_i32 : i32, i32
  }
  func.func @transform_1(%arg0: i32) -> (i32, i32) {
    %c0_i32 = arith.constant 0 : i32
    %c0_i32_0 = arith.constant 0 : i32
    %c0_i32_1 = arith.constant 0 : i32
    return %c0_i32, %c0_i32_0 : i32, i32
  }
  func.func @transform_2(%arg0: i32) -> (i32, i32) {
    %c0_i32 = arith.constant 0 : i32
    %c0_i32_0 = arith.constant 0 : i32
    %c0_i32_1 = arith.constant 0 : i32
    return %c0_i32, %c0_i32_0 : i32, i32
  }
  func.func @transform_3(%arg0: i32) -> (i32, i32) {
    %c0_i32 = arith.constant 0 : i32
    %c0_i32_0 = arith.constant 0 : i32
    return %arg0, %c0_i32 : i32, i32
  }
}

module attributes {stable_mosaic.version = 11 : i64} {
  func.func @_gemm_bias_act_kernel(%arg0: i32, %arg1: memref<2x512xbf16, #tpu.memory_space<vmem>>, %arg2: memref<512x64xbf16, #tpu.memory_space<vmem>>, %arg3: memref<1x64xf32, #tpu.memory_space<vmem>>, %arg4: memref<2x64xbf16, #tpu.memory_space<vmem>>) attributes {dimension_semantics = [#tpu.dimension_semantics<parallel>], iteration_bounds = array<i64: 1>, scalar_prefetch = 0 : i64, scratch_operands = 0 : i64, tpu.core_type = #tpu.core_type<tc>, window_params = [{transform_indices = @transform_0, window_bounds = array<i64: 2, 512>}, {pipeline_mode = #tpu.pipeline_mode<synchronous>, transform_indices = @transform_1, window_bounds = array<i64: 512, 64>}, {pipeline_mode = #tpu.pipeline_mode<synchronous>, transform_indices = @transform_2, window_bounds = array<i64: 1, 64>}, {transform_indices = @transform_3, window_bounds = array<i64: 2, 64>}]} {
    %c0 = arith.constant 0 : index
    %c0_0 = arith.constant 0 : index
    %0 = vector.load %arg1[%c0, %c0_0] : memref<2x512xbf16, #tpu.memory_space<vmem>>, vector<2x512xbf16>
    %c0_1 = arith.constant 0 : index
    %c0_2 = arith.constant 0 : index
    %1 = vector.load %arg2[%c0_1, %c0_2] : memref<512x64xbf16, #tpu.memory_space<vmem>>, vector<512x64xbf16>
    %cst = arith.constant dense<0.000000e+00> : vector<2x64xf32>
    %2 = tpu.matmul %0, %1, %cst {dimension_numbers = #tpu.dot_dimension_numbers<[1], [0], [0], [1], [0, 0, 1, 1], [], []>} : vector<2x512xbf16>, vector<512x64xbf16>, vector<2x64xf32> -> vector<2x64xf32>
    %c0_3 = arith.constant 0 : index
    %c0_4 = arith.constant 0 : index
    %3 = vector.load %arg3[%c0_3, %c0_4] : memref<1x64xf32, #tpu.memory_space<vmem>>, vector<1x64xf32>
    %4 = vector.broadcast %3 : vector<1x64xf32> to vector<2x64xf32>
    %5 = arith.addf %2, %4 : vector<2x64xf32>
    %cst_5 = arith.constant 0.000000e+00 : f32
    %6 = vector.broadcast %cst_5 : f32 to vector<2x64xf32>
    %7 = arith.cmpf oge, %5, %6 : vector<2x64xf32>
    %cst_6 = arith.constant 0.00999999977 : f32
    %8 = vector.broadcast %cst_6 : f32 to vector<2x64xf32>
    %9 = arith.mulf %8, %5 : vector<2x64xf32>
    %10 = arith.select %7, %5, %9 : vector<2x64xi1>, vector<2x64xf32>
    %11 = arith.truncf %10 : vector<2x64xf32> to vector<2x64xbf16>
    %c0_7 = arith.constant 0 : index
    %c0_8 = arith.constant 0 : index
    %12 = vector.load %arg4[%c0_7, %c0_8] : memref<2x64xbf16, #tpu.memory_space<vmem>>, vector<2x64xbf16>
    tpu.vector_store %arg4[%c0_7, %c0_8], %11 {strides = array<i32>} : memref<2x64xbf16, #tpu.memory_space<vmem>>, vector<2x64xbf16>,
    return
  }
  func.func @transform_0(%arg0: i32) -> (i32, i32) {
    %c0_i32 = arith.constant 0 : i32
    %c0_i32_0 = arith.constant 0 : i32
    return %arg0, %c0_i32 : i32, i32
  }
  func.func @transform_1(%arg0: i32) -> (i32, i32) {
    %c0_i32 = arith.constant 0 : i32
    %c0_i32_0 = arith.constant 0 : i32
    %c0_i32_1 = arith.constant 0 : i32
    return %c0_i32, %c0_i32_0 : i32, i32
  }
  func.func @transform_2(%arg0: i32) -> (i32, i32) {
    %c0_i32 = arith.constant 0 : i32
    %c0_i32_0 = arith.constant 0 : i32
    %c0_i32_1 = arith.constant 0 : i32
    return %c0_i32, %c0_i32_0 : i32, i32
  }
  func.func @transform_3(%arg0: i32) -> (i32, i32) {
    %c0_i32 = arith.constant 0 : i32
    %c0_i32_0 = arith.constant 0 : i32
    return %arg0, %c0_i32 : i32, i32
  }
}

module attributes {stable_mosaic.version = 11 : i64} {
  func.func @_gemm_bias_act_kernel(%arg0: i32, %arg1: memref<2x576xbf16, #tpu.memory_space<vmem>>, %arg2: memref<576x1xbf16, #tpu.memory_space<vmem>>, %arg3: memref<1x1xf32, #tpu.memory_space<vmem>>, %arg4: memref<2x1xf32, #tpu.memory_space<vmem>>) attributes {dimension_semantics = [#tpu.dimension_semantics<parallel>], iteration_bounds = array<i64: 1>, scalar_prefetch = 0 : i64, scratch_operands = 0 : i64, tpu.core_type = #tpu.core_type<tc>, window_params = [{transform_indices = @transform_0, window_bounds = array<i64: 2, 576>}, {pipeline_mode = #tpu.pipeline_mode<synchronous>, transform_indices = @transform_1, window_bounds = array<i64: 576, 1>}, {pipeline_mode = #tpu.pipeline_mode<synchronous>, transform_indices = @transform_2, window_bounds = array<i64: 1, 1>}, {transform_indices = @transform_3, window_bounds = array<i64: 2, 1>}]} {
    %c0 = arith.constant 0 : index
    %c0_0 = arith.constant 0 : index
    %0 = vector.load %arg1[%c0, %c0_0] : memref<2x576xbf16, #tpu.memory_space<vmem>>, vector<2x576xbf16>
    %c0_1 = arith.constant 0 : index
    %c0_2 = arith.constant 0 : index
    %1 = vector.load %arg2[%c0_1, %c0_2] : memref<576x1xbf16, #tpu.memory_space<vmem>>, vector<576x1xbf16>
    %cst = arith.constant dense<0.000000e+00> : vector<2x1xf32>
    %2 = tpu.matmul %0, %1, %cst {dimension_numbers = #tpu.dot_dimension_numbers<[1], [0], [0], [1], [0, 0, 1, 1], [], []>} : vector<2x576xbf16>, vector<576x1xbf16>, vector<2x1xf32> -> vector<2x1xf32>
    %c0_3 = arith.constant 0 : index
    %c0_4 = arith.constant 0 : index
    %3 = vector.load %arg3[%c0_3, %c0_4] : memref<1x1xf32, #tpu.memory_space<vmem>>, vector<1x1xf32>
    %4 = vector.broadcast %3 : vector<1x1xf32> to vector<2x1xf32>
    %5 = arith.addf %2, %4 : vector<2x1xf32>
    %c0_5 = arith.constant 0 : index
    %c0_6 = arith.constant 0 : index
    %6 = vector.load %arg4[%c0_5, %c0_6] : memref<2x1xf32, #tpu.memory_space<vmem>>, vector<2x1xf32>
    tpu.vector_store %arg4[%c0_5, %c0_6], %5 {strides = array<i32>} : memref<2x1xf32, #tpu.memory_space<vmem>>, vector<2x1xf32>,
    return
  }
  func.func @transform_0(%arg0: i32) -> (i32, i32) {
    %c0_i32 = arith.constant 0 : i32
    %c0_i32_0 = arith.constant 0 : i32
    return %arg0, %c0_i32 : i32, i32
  }
  func.func @transform_1(%arg0: i32) -> (i32, i32) {
    %c0_i32 = arith.constant 0 : i32
    %c0_i32_0 = arith.constant 0 : i32
    %c0_i32_1 = arith.constant 0 : i32
    return %c0_i32, %c0_i32_0 : i32, i32
  }
  func.func @transform_2(%arg0: i32) -> (i32, i32) {
    %c0_i32 = arith.constant 0 : i32
    %c0_i32_0 = arith.constant 0 : i32
    %c0_i32_1 = arith.constant 0 : i32
    return %c0_i32, %c0_i32_0 : i32, i32
  }
  func.func @transform_3(%arg0: i32) -> (i32, i32) {
    %c0_i32 = arith.constant 0 : i32
    %c0_i32_0 = arith.constant 0 : i32
    return %arg0, %c0_i32 : i32, i32
  }
}

module attributes {stable_mosaic.version = 11 : i64} {
  func.func @_gemm_bias_act_kernel(%arg0: i32, %arg1: memref<2x64xbf16, #tpu.memory_space<vmem>>, %arg2: memref<64x5xbf16, #tpu.memory_space<vmem>>, %arg3: memref<1x5xf32, #tpu.memory_space<vmem>>, %arg4: memref<2x5xf32, #tpu.memory_space<vmem>>) attributes {dimension_semantics = [#tpu.dimension_semantics<parallel>], iteration_bounds = array<i64: 1>, scalar_prefetch = 0 : i64, scratch_operands = 0 : i64, tpu.core_type = #tpu.core_type<tc>, window_params = [{transform_indices = @transform_0, window_bounds = array<i64: 2, 64>}, {pipeline_mode = #tpu.pipeline_mode<synchronous>, transform_indices = @transform_1, window_bounds = array<i64: 64, 5>}, {pipeline_mode = #tpu.pipeline_mode<synchronous>, transform_indices = @transform_2, window_bounds = array<i64: 1, 5>}, {transform_indices = @transform_3, window_bounds = array<i64: 2, 5>}]} {
    %c0 = arith.constant 0 : index
    %c0_0 = arith.constant 0 : index
    %0 = vector.load %arg1[%c0, %c0_0] : memref<2x64xbf16, #tpu.memory_space<vmem>>, vector<2x64xbf16>
    %c0_1 = arith.constant 0 : index
    %c0_2 = arith.constant 0 : index
    %1 = vector.load %arg2[%c0_1, %c0_2] : memref<64x5xbf16, #tpu.memory_space<vmem>>, vector<64x5xbf16>
    %cst = arith.constant dense<0.000000e+00> : vector<2x5xf32>
    %2 = tpu.matmul %0, %1, %cst {dimension_numbers = #tpu.dot_dimension_numbers<[1], [0], [0], [1], [0, 0, 1, 1], [], []>} : vector<2x64xbf16>, vector<64x5xbf16>, vector<2x5xf32> -> vector<2x5xf32>
    %c0_3 = arith.constant 0 : index
    %c0_4 = arith.constant 0 : index
    %3 = vector.load %arg3[%c0_3, %c0_4] : memref<1x5xf32, #tpu.memory_space<vmem>>, vector<1x5xf32>
    %4 = vector.broadcast %3 : vector<1x5xf32> to vector<2x5xf32>
    %5 = arith.addf %2, %4 : vector<2x5xf32>
    %c0_5 = arith.constant 0 : index
    %c0_6 = arith.constant 0 : index
    %6 = vector.load %arg4[%c0_5, %c0_6] : memref<2x5xf32, #tpu.memory_space<vmem>>, vector<2x5xf32>
    tpu.vector_store %arg4[%c0_5, %c0_6], %5 {strides = array<i32>} : memref<2x5xf32, #tpu.memory_space<vmem>>, vector<2x5xf32>,
    return
  }
  func.func @transform_0(%arg0: i32) -> (i32, i32) {
    %c0_i32 = arith.constant 0 : i32
    %c0_i32_0 = arith.constant 0 : i32
    return %arg0, %c0_i32 : i32, i32
  }
  func.func @transform_1(%arg0: i32) -> (i32, i32) {
    %c0_i32 = arith.constant 0 : i32
    %c0_i32_0 = arith.constant 0 : i32
    %c0_i32_1 = arith.constant 0 : i32
    return %c0_i32, %c0_i32_0 : i32, i32
  }
  func.func @transform_2(%arg0: i32) -> (i32, i32) {
    %c0_i32 = arith.constant 0 : i32
    %c0_i32_0 = arith.constant 0 : i32
    %c0_i32_1 = arith.constant 0 : i32
    return %c0_i32, %c0_i32_0 : i32, i32
  }
  func.func @transform_3(%arg0: i32) -> (i32, i32) {
    %c0_i32 = arith.constant 0 : i32
    %c0_i32_0 = arith.constant 0 : i32
    return %arg0, %c0_i32 : i32, i32
  }
}

</mosaic_0001>

<llo_original>
// kernel: forward.6
$region0: #{forward.6}
  #allocation0 [shape = 'u32[]', space=smem, size = 0x4, offset = 0x4, fixed_abs, tag = 'smem constant byte address 0x4 - core index']
  #allocation1 [shape = 'u32[144,128]{1,0:T(1,128)}', space=vmem, size = 0x12000, scoped, tag = 'internal scratch']
  %s0 = inlined_call_operand.vmem [shape: bf16[128,64], index: 0, kind: input, shape index: {}]
  %s1 = inlined_call_operand.vmem [shape: bf16[64,8], index: 1, kind: input, shape index: {}]
  %s2 = inlined_call_operand.vmem [shape: f32[1,8], index: 2, kind: input, shape index: {}]
  %s3 = inlined_call_operand.vmem [shape: bf16[128,8], index: 3, kind: output, shape index: {}]
  %s4 = sld [smem:[#allocation0]]
  $region45: #{forward.6} parent=0
    _
  %s6 = ssub.s32 1, %s4
  %s7 = scalar_select 0, %s6, %s4
  loop: start=0, step=1, limit=4
  $region2: #{forward.6} parent=0 // loop_pre_header
    _
  $region3: #{forward.6} parent=0 // loop_header
    %s9 = sphi 0, %s13
    %p10 = scmp.ge.s32.totalorder %s9, 4
    %s19 = sphi 0, %s21
    %s22 = sphi 0, %s19
    %s23 = sphi 0, %s22
    %s39 = sphi 0, %s23
    %s43 = sphi 0, %s43
    %s45 = sphi 0, %s43
    %s46 = sphi 0, %s45
    %s60 = sphi 0, %s46
    %s64 = sphi 0, %s64
    %s66 = sphi 0, %s64
    %s67 = sphi 0, %s66
    %s81 = sphi 0, %s67
    %s87 = sphi 0, %s89
    %s90 = sphi 0, %s87
    %s91 = sphi 0, %s90
    %s107 = sphi 0, %s91
  $region4: #{forward.6} parent=0 // loop_header_branch
    %12 = sbr.rel (%p10) target = $region8
  $region5: #{forward.6} parent=0 // loop_body
    %s14 = ssub.s32 %s9, 1
    %s15 = ssub.s32 %s9, 2
    %s16 = sadd.s32 %s9, 1
    %s17 = ssub.s32 %s9, %s16
    %p18 = scmp.eq.s32.totalorder %s17, 0
    %s20 = sadd.s32 %s19, 1
    %s21 = scalar_select %p18, %s19, %s20
    %p24 = pneg %p18
    %p25 = scmp.eq.s32.totalorder %s9, 1
    %p26 = por %p24, %p25
    %p27 = scmp.ne.s32.totalorder %s19, %s22
    %p28 = scmp.eq.s32.totalorder %s9, 0
    %p29 = por %p27, %p28
    %p30 = scmp.ne.s32.totalorder %s19, %s22
    %p31 = scmp.eq.s32.totalorder %s14, 1
    %p32 = por %p30, %p31
    %p33 = scmp.ne.s32.totalorder %s22, %s23
    %p34 = scmp.eq.s32.totalorder %s14, 0
    %p35 = por %p33, %p34
    %p36 = scmp.ne.s32.totalorder %s22, %s23
    %p37 = scmp.eq.s32.totalorder %s15, 1
    %p38 = por %p36, %p37
    %p40 = scmp.ne.s32.totalorder %s23, %s39
    %p41 = scmp.eq.s32.totalorder %s15, 0
    %p42 = por %p40, %p41
    %s44 = sadd.s32 %s43, 1
    %p47 = scmp.eq.s32.totalorder %s9, 1
    %p48 = scmp.ne.s32.totalorder %s43, %s45
    %p49 = scmp.eq.s32.totalorder %s9, 0
    %p50 = por %p48, %p49
    %p51 = scmp.ne.s32.totalorder %s43, %s45
    %p52 = scmp.eq.s32.totalorder %s14, 1
    %p53 = por %p51, %p52
    %p54 = scmp.ne.s32.totalorder %s45, %s46
    %p55 = scmp.eq.s32.totalorder %s14, 0
    %p56 = por %p54, %p55
    %p57 = scmp.ne.s32.totalorder %s45, %s46
    %p58 = scmp.eq.s32.totalorder %s15, 1
    %p59 = por %p57, %p58
    %p61 = scmp.ne.s32.totalorder %s46, %s60
    %p62 = scmp.eq.s32.totalorder %s15, 0
    %p63 = por %p61, %p62
    %s65 = sadd.s32 %s64, 1
    %p68 = scmp.eq.s32.totalorder %s9, 1
    %p69 = scmp.ne.s32.totalorder %s64, %s66
    %p70 = scmp.eq.s32.totalorder %s9, 0
    %p71 = por %p69, %p70
    %p72 = scmp.ne.s32.totalorder %s64, %s66
    %p73 = scmp.eq.s32.totalorder %s14, 1
    %p74 = por %p72, %p73
    %p75 = scmp.ne.s32.totalorder %s66, %s67
    %p76 = scmp.eq.s32.totalorder %s14, 0
    %p77 = por %p75, %p76
    %p78 = scmp.ne.s32.totalorder %s66, %s67
    %p79 = scmp.eq.s32.totalorder %s15, 1
    %p80 = por %p78, %p79
    %p82 = scmp.ne.s32.totalorder %s67, %s81
    %p83 = scmp.eq.s32.totalorder %s15, 0
    %p84 = por %p82, %p83
    %s85 = ssub.s32 %s9, %s16
    %p86 = scmp.eq.s32.totalorder %s85, 0
    %s88 = sadd.s32 %s87, 1
    %s89 = scalar_select %p86, %s87, %s88
    %p92 = pneg %p86
    %p93 = scmp.eq.s32.totalorder %s9, 1
    %p94 = por %p92, %p93
    %p95 = scmp.ne.s32.totalorder %s87, %s90
    %p96 = scmp.eq.s32.totalorder %s9, 0
    %p97 = por %p95, %p96
    %p98 = scmp.ne.s32.totalorder %s87, %s90
    %p99 = scmp.eq.s32.totalorder %s14, 1
    %p100 = por %p98, %p99
    %p101 = scmp.ne.s32.totalorder %s90, %s91
    %p102 = scmp.eq.s32.totalorder %s14, 0
    %p103 = por %p101, %p102
    %p104 = scmp.ne.s32.totalorder %s90, %s91
    %p105 = scmp.eq.s32.totalorder %s15, 1
    %p106 = por %p104, %p105
    %p108 = scmp.ne.s32.totalorder %s91, %s107
    %p109 = scmp.eq.s32.totalorder %s15, 0
    %p110 = por %p108, %p109
    %p111 = scmp.le.s32.totalorder 1, %s9
    %p112 = scmp.lt.s32.totalorder %s9, 3
    %p113 = pnand %p111, %p112
    %p114 = pneg %p113
    // Predicated region
    $region9: #{forward.6} parent=5 // pred_check
      _
    $region10: #{forward.6} parent=5 // pred_check_branch
      %116 = sbr.rel (%p113) target = $region12
    $region11: #{forward.6} parent=5 // pred_region
      %s117 = ssub.s32 %s9, 1
      // Predicated region
      $region13: #{forward.6} parent=11 // pred_check
        %p118 = pneg %p56
      $region14: #{forward.6} parent=11 // pred_check_branch
        %120 = sbr.rel (%p118) target = $region16
      $region15: #{forward.6} parent=11 // pred_region
        _
      $region16: #{forward.6} parent=11 // pred_fallthru
        _
      // Predicated region
      $region17: #{forward.6} parent=11 // pred_check
        %p121 = pneg %p77
      $region18: #{forward.6} parent=11 // pred_check_branch
        %123 = sbr.rel (%p121) target = $region20
      $region19: #{forward.6} parent=11 // pred_region
        _
      $region20: #{forward.6} parent=11 // pred_fallthru
        _
    $region12: #{forward.6} parent=5 // pred_fallthru
      _
    %p124 = scmp.lt.s32.totalorder %s9, 2
    // Predicated region
    $region21: #{forward.6} parent=5 // pred_check
      %p125 = pneg %p124
    $region22: #{forward.6} parent=5 // pred_check_branch
      %127 = sbr.rel (%p125) target = $region24
    $region23: #{forward.6} parent=5 // pred_region
      // Predicated region
      $region25: #{forward.6} parent=23 // pred_check
        %p128 = pneg %p29
      $region26: #{forward.6} parent=23 // pred_check_branch
        %130 = sbr.rel (%p128) target = $region28
      $region27: #{forward.6} parent=23 // pred_region
        %s131 = smul.u32 8, %s9
        %p132 = scmp.lt.s32.totalorder %s131, 15
        %s133 = scalar_select %p132, %s131, 15
        %s134 = smul.addr %s133, 4
        %s135 = scalar_lea.vmem %s0, %s134
        %s136 = smul.u32 8, %s9
      $region28: #{forward.6} parent=23 // pred_fallthru
        _
    $region24: #{forward.6} parent=5 // pred_fallthru
      _
    %p137 = scmp.le.s32.totalorder 1, %s9
    %p138 = scmp.lt.s32.totalorder %s9, 3
    %p139 = pnand %p137, %p138
    %p140 = pneg %p139
    // Predicated region
    $region29: #{forward.6} parent=5 // pred_check
      _
    $region30: #{forward.6} parent=5 // pred_check_branch
      %142 = sbr.rel (%p139) target = $region32
    $region31: #{forward.6} parent=5 // pred_region
      %s143 = ssub.s32 %s9, 1
      %s144 = smul.u32 8, %s14
      %p145 = scmp.lt.s32.totalorder %s144, 15
      %s146 = scalar_select %p145, %s144, 15
      %s147 = smul.addr %s146, 4
      %s148 = scalar_lea.vmem %s0, %s147
      %p149 = pneg %p35
      %p150 = pneg %p32
      %p151 = pneg %p56
      %p152 = pneg %p53
      %p153 = pneg %p77
      %p154 = pneg %p74
      %p155 = pneg %p103
      %p156 = pneg %p100
      %s157 = smul.u32 8, %s14
      %p158 = scmp.lt.s32.totalorder %s157, 15
      %s159 = scalar_select %p158, %s157, 15
      %s160 = smul.addr %s159, 4
      %s161 = scalar_lea.vmem %s3, %s160
      %s162 = smul.u32 8, %s14
      %p163 = scmp.lt.s32.totalorder %s162, 15
      %s164 = scalar_select %p163, %s162, 15
      %s165 = smul.addr %s164, 4
      %s166 = scalar_lea.vmem %s0, %s165
      %s167 = smul.u32 8, %s14
      %s168 = smul.u32 8, %s14
      %p169 = scmp.lt.s32.totalorder %s168, 15
      %s170 = scalar_select %p169, %s168, 15
      %s171 = smul.addr %s170, 4
      %s172 = scalar_lea.vmem %s3, %s171
      %s173 = smul.u32 8, %s14
      %v175 = vld [vmem:[%s166] sm:$0xf]
      %v176 = vld [vmem:[%s166 + $0x4] sm:$0xf]
      %v177 = vld [vmem:[%s166 + $0x8] sm:$0xf]
      %v178 = vld [vmem:[%s166 + $0xc] sm:$0xf]
      %v179 = vld [vmem:[%s166 + $0x10] sm:$0xf]
      %v180 = vld [vmem:[%s166 + $0x14] sm:$0xf]
      %v181 = vld [vmem:[%s166 + $0x18] sm:$0xf]
      %v182 = vld [vmem:[%s166 + $0x1c] sm:$0xf]
      %v183 = vld [vmem:[%s1] sm:$0xf]
      %v184 = vld [vmem:[%s1 + $0x4] sm:$0xf]
      %v185 = vld [vmem:[%s1 + $0x8] sm:$0xf]
      %v186 = vld [vmem:[%s1 + $0xc] sm:$0xf]
      %v187 = vld [vmem:[%s1 + $0x10] sm:$0xf]
      %v188 = vld [vmem:[%s1 + $0x14] sm:$0xf]
      %v189 = vld [vmem:[%s1 + $0x18] sm:$0xf]
      %v190 = vld [vmem:[%s1 + $0x1c] sm:$0xf]
      %v191 = vld [vmem:[%s2] sm:$0x1]
      %v193 = vlaneseq
      %v194 = vshrl.u32 %v193, 7
      %v195 = vsub.s32 0, %v194
      %v196 = vrot.slane %v191, %v195
      %v206 = vunpack.c.l.b16 %v175
      %v207 = vunpack.c.l.b16 %v176
      %v208 = vunpack.c.l.b16 %v177
      %v209 = vunpack.c.l.b16 %v178
      %v210 = vunpack.c.l.b16 %v179
      %v211 = vunpack.c.l.b16 %v180
      %v212 = vunpack.c.l.b16 %v181
      %v213 = vunpack.c.l.b16 %v182
      %v214 = vpack.c.b16 %v207, %v206
      %v215 = vpack.c.b16 %v209, %v208
      %v216 = vpack.c.b16 %v211, %v210
      %v217 = vpack.c.b16 %v213, %v212
      %v226 = vunpack.c.l.b16 %v183
      %v227 = vunpack.c.l.b16 %v184
      %v228 = vunpack.c.l.b16 %v185
      %v229 = vunpack.c.l.b16 %v186
      %v230 = vunpack.c.l.b16 %v187
      %v231 = vunpack.c.l.b16 %v188
      %v232 = vunpack.c.l.b16 %v189
      %v233 = vunpack.c.l.b16 %v190
      %v234 = vpack.c.b16 %v227, %v226
      %v235 = vpack.c.b16 %v229, %v228
      %v236 = vpack.c.b16 %v231, %v230
      %v237 = vpack.c.b16 %v233, %v232
      %vm242 = vcmask 523264
      %v244 = vsel %vm242, %v214, 0
      %v247 = vsel %vm242, %v215, 0
      %v250 = vsel %vm242, %v216, 0
      %v253 = vsel %vm242, %v217, 0
      %255 = vmatprep.subr.bf16.mxu0 0
      %256 = vmatpush1.bf16.msra.mxu0 %v234
      %257 = vmatprep.subr.bf16.mxu0 0
      %258 = vmatpush1.bf16.msra.mxu0 %v235
      %259 = vmatprep.subr.bf16.mxu0 0
      %260 = vmatpush1.bf16.msra.mxu0 %v236
      %261 = vmatprep.subr.bf16.mxu0 0
      %262 = vmatpush1.bf16.msra.mxu0 %v237
      %263 = vmatprep.subr.bf16.mxu0 0
      %264 = vmatpush1.bf16.msra.mxu0 0
      %265 = vmatprep.subr.bf16.mxu0 0
      %266 = vmatpush1.bf16.msra.mxu0 0
      %267 = vmatprep.subr.bf16.mxu0 0
      %268 = vmatpush1.bf16.msra.mxu0 0
      %269 = vmatprep.subr.bf16.mxu0 0
      %270 = vmatpush1.bf16.msra.mxu0 0
      %271 = vmatprep.subr.bf16.mxu0 0
      %272 = vmatpush1.bf16.msra.mxu0 0
      %273 = vmatprep.subr.bf16.mxu0 0
      %274 = vmatpush1.bf16.msra.mxu0 0
      %275 = vmatprep.subr.bf16.mxu0 0
      %276 = vmatpush1.bf16.msra.mxu0 0
      %277 = vmatprep.subr.bf16.mxu0 0
      %278 = vmatpush1.bf16.msra.mxu0 0
      %279 = vmatprep.subr.bf16.mxu0 0
      %280 = vmatpush1.bf16.msra.mxu0 0
      %281 = vmatprep.subr.bf16.mxu0 0
      %282 = vmatpush1.bf16.msra.mxu0 0
      %283 = vmatprep.subr.bf16.mxu0 0
      %284 = vmatpush1.bf16.msra.mxu0 0
      %285 = vmatprep.subr.bf16.mxu0 0
      %286 = vmatpush1.bf16.msra.mxu0 0
      %287 = vmatprep.mubr.bf16.mxu0 0
      %288 = vmatmul.mubr.bf16.gmra.mrb[0].mxu0 %v244
      %v289 = vpop.f32.mrb[0].mxu0
      %v290 = vadd.f32 %v196, %v289
      %v291 = vpop.f32.mrb[0].mxu0
      %v292 = vpop.f32.mrb[0].mxu0
      %v293 = vadd.f32 %v196, %v292
      %v294 = vpop.f32.mrb[0].mxu0
      %295 = vmatprep.mubr.bf16.mxu0 0
      %296 = vmatmul.mubr.bf16.gmra.mrb[0].mxu0 %v247
      %v297 = vpop.f32.mrb[0].mxu0
      %v298 = vadd.f32 %v196, %v297
      %v299 = vpop.f32.mrb[0].mxu0
      %v300 = vpop.f32.mrb[0].mxu0
      %v301 = vadd.f32 %v196, %v300
      %v302 = vpop.f32.mrb[0].mxu0
      %303 = vmatprep.mubr.bf16.mxu0 0
      %304 = vmatmul.mubr.bf16.gmra.mrb[0].mxu0 %v250
      %v305 = vpop.f32.mrb[0].mxu0
      %v306 = vadd.f32 %v196, %v305
      %v307 = vpop.f32.mrb[0].mxu0
      %v308 = vpop.f32.mrb[0].mxu0
      %v309 = vadd.f32 %v196, %v308
      %v310 = vpop.f32.mrb[0].mxu0
      %311 = vmatprep.mubr.bf16.mxu0 0
      %312 = vmatmul.mubr.bf16.gmra.mrb[0].mxu0 %v253
      %v313 = vpop.f32.mrb[0].mxu0
      %v314 = vadd.f32 %v196, %v313
      %v315 = vpop.f32.mrb[0].mxu0
      %v316 = vpop.f32.mrb[0].mxu0
      %v317 = vadd.f32 %v196, %v316
      %v318 = vpop.f32.mrb[0].mxu0
      %319 = vdwg.mxu0
      %vm320 = vcmp.ge.f32.partialorder %v290, 0.0
      %vm321 = vcmp.ge.f32.partialorder %v293, 0.0
      %vm322 = vcmp.ge.f32.partialorder %v298, 0.0
      %vm323 = vcmp.ge.f32.partialorder %v301, 0.0
      %vm324 = vcmp.ge.f32.partialorder %v306, 0.0
      %vm325 = vcmp.ge.f32.partialorder %v309, 0.0
      %vm326 = vcmp.ge.f32.partialorder %v314, 0.0
      %vm327 = vcmp.ge.f32.partialorder %v317, 0.0
      %v328 = vmul.f32 %v290, 0.01
      %v329 = vmul.f32 %v293, 0.01
      %v330 = vmul.f32 %v298, 0.01
      %v331 = vmul.f32 %v301, 0.01
      %v332 = vmul.f32 %v306, 0.01
      %v333 = vmul.f32 %v309, 0.01
      %v334 = vmul.f32 %v314, 0.01
      %v335 = vmul.f32 %v317, 0.01
      %v336 = vsel %vm320, %v290, %v328
      %v337 = vsel %vm321, %v293, %v329
      %v338 = vsel %vm322, %v298, %v330
      %v339 = vsel %vm323, %v301, %v331
      %v340 = vsel %vm324, %v306, %v332
      %v341 = vsel %vm325, %v309, %v333
      %v342 = vsel %vm326, %v314, %v334
      %v343 = vsel %vm327, %v317, %v335
      %v344 = vpack.c.bf16 %v337, %v336
      %v345 = vpack.c.bf16 %v339, %v338
      %v346 = vpack.c.bf16 %v341, %v340
      %v347 = vpack.c.bf16 %v343, %v342
      %v352 = vunpack.c.l.b16 %v344
      %v353 = vunpack.c.h.b16 %v344
      %v354 = vunpack.c.l.b16 %v345
      %v355 = vunpack.c.h.b16 %v345
      %v356 = vunpack.c.l.b16 %v346
      %v357 = vunpack.c.h.b16 %v346
      %v358 = vunpack.c.l.b16 %v347
      %v359 = vunpack.c.h.b16 %v347
      %v360 = vpack.c.b16 %v352, %v352
      %v361 = vpack.c.b16 %v353, %v353
      %v362 = vpack.c.b16 %v354, %v354
      %v363 = vpack.c.b16 %v355, %v355
      %v364 = vpack.c.b16 %v356, %v356
      %v365 = vpack.c.b16 %v357, %v357
      %v366 = vpack.c.b16 %v358, %v358
      %v367 = vpack.c.b16 %v359, %v359
      %vm376 = vcmask 60416
      %377 = vst.msk [vmem:[%s172] sm:$0xf] %vm376, %v360
      %378 = vst.msk [vmem:[%s172 + $0x4] sm:$0xf] %vm376, %v361
      %379 = vst.msk [vmem:[%s172 + $0x8] sm:$0xf] %vm376, %v362
      %380 = vst.msk [vmem:[%s172 + $0xc] sm:$0xf] %vm376, %v363
      %381 = vst.msk [vmem:[%s172 + $0x10] sm:$0xf] %vm376, %v364
      %382 = vst.msk [vmem:[%s172 + $0x14] sm:$0xf] %vm376, %v365
      %383 = vst.msk [vmem:[%s172 + $0x18] sm:$0xf] %vm376, %v366
      %384 = vst.msk [vmem:[%s172 + $0x1c] sm:$0xf] %vm376, %v367
      %s385 = smul.u32 8, %s14
      %p386 = scmp.lt.s32.totalorder %s385, 15
      %s387 = scalar_select %p386, %s385, 15
      %s388 = smul.addr %s387, 4
      %s389 = scalar_lea.vmem %s3, %s388
      // Predicated region
      $region33: #{forward.6} parent=31 // pred_check
        %p390 = pneg %p100
      $region34: #{forward.6} parent=31 // pred_check_branch
        %392 = sbr.rel (%p390) target = $region36
      $region35: #{forward.6} parent=31 // pred_region
        %s393 = smul.u32 8, %s14
      $region36: #{forward.6} parent=31 // pred_fallthru
        _
    $region32: #{forward.6} parent=5 // pred_fallthru
      _
    %p394 = scmp.le.s32.totalorder 2, %s9
    // Predicated region
    $region37: #{forward.6} parent=5 // pred_check
      %p395 = pneg %p394
    $region38: #{forward.6} parent=5 // pred_check_branch
      %397 = sbr.rel (%p395) target = $region40
    $region39: #{forward.6} parent=5 // pred_region
      %s398 = ssub.s32 %s9, 2
      // Predicated region
      $region41: #{forward.6} parent=39 // pred_check
        %p399 = pneg %p106
      $region42: #{forward.6} parent=39 // pred_check_branch
        %401 = sbr.rel (%p399) target = $region44
      $region43: #{forward.6} parent=39 // pred_region
        %s402 = smul.u32 8, %s15
        %p403 = scmp.lt.s32.totalorder %s402, 15
        %s404 = scalar_select %p403, %s402, 15
        %s405 = smul.addr %s404, 4
        %s406 = scalar_lea.vmem %s3, %s405
      $region44: #{forward.6} parent=39 // pred_fallthru
        _
    $region40: #{forward.6} parent=5 // pred_fallthru
      _
  $region6: #{forward.6} parent=0 // loop_footer
    %s13 = sadd.s32 1, %s9
  $region7: #{forward.6} parent=0 // loop_footer_branch
    %8 = sbr.rel target = $region3
  $region8: #{forward.6} parent=0 // loop_exit
    _

// kernel: forward.7
$region0: #{forward.7}
  #allocation0 [shape = 'u32[]', space=smem, size = 0x4, offset = 0x4, fixed_abs, tag = 'smem constant byte address 0x4 - core index']
  #allocation1 [shape = 'u32[144,128]{1,0:T(1,128)}', space=vmem, size = 0x12000, scoped, tag = 'internal scratch']
  %s0 = inlined_call_operand.vmem [shape: bf16[32,128], index: 0, kind: input, shape index: {}]
  %s1 = inlined_call_operand.vmem [shape: bf16[128,16], index: 1, kind: input, shape index: {}]
  %s2 = inlined_call_operand.vmem [shape: f32[1,16], index: 2, kind: input, shape index: {}]
  %s3 = inlined_call_operand.vmem [shape: bf16[32,16], index: 3, kind: output, shape index: {}]
  %s4 = sld [smem:[#allocation0]]
  $region22: #{forward.7} parent=0
    _
  %s6 = ssub.s32 1, %s4
  %s7 = scalar_select 0, %s6, %s4
  // Predicated region
  $region2: #{forward.7} parent=0 // pred_check
    _
  $region3: #{forward.7} parent=0 // pred_check_branch
    %9 = sbr.rel (0) target = $region5
  $region4: #{forward.7} parent=0 // pred_region
    _
  $region5: #{forward.7} parent=0 // pred_fallthru
    _
  // Predicated region
  $region6: #{forward.7} parent=0 // pred_check
    _
  $region7: #{forward.7} parent=0 // pred_check_branch
    %11 = sbr.rel (0) target = $region9
  $region8: #{forward.7} parent=0 // pred_region
    _
  $region9: #{forward.7} parent=0 // pred_fallthru
    _
  // Predicated region
  $region10: #{forward.7} parent=0 // pred_check
    _
  $region11: #{forward.7} parent=0 // pred_check_branch
    %13 = sbr.rel (0) target = $region13
  $region12: #{forward.7} parent=0 // pred_region
    _
  $region13: #{forward.7} parent=0 // pred_fallthru
    _
  %v15 = vld [vmem:[%s0] sm:$0xf]
  %v16 = vld [vmem:[%s0 + $0x4] sm:$0xf]
  %v17 = vld [vmem:[%s0 + $0x8] sm:$0xf]
  %v18 = vld [vmem:[%s0 + $0xc] sm:$0xf]
  %v19 = vld [vmem:[%s1] sm:$0xf]
  %v20 = vld [vmem:[%s1 + $0x4] sm:$0xf]
  %v21 = vld [vmem:[%s1 + $0x8] sm:$0xf]
  %v22 = vld [vmem:[%s1 + $0xc] sm:$0xf]
  %v23 = vld [vmem:[%s1 + $0x10] sm:$0xf]
  %v24 = vld [vmem:[%s1 + $0x14] sm:$0xf]
  %v25 = vld [vmem:[%s1 + $0x18] sm:$0xf]
  %v26 = vld [vmem:[%s1 + $0x1c] sm:$0xf]
  %v27 = vld [vmem:[%s1 + $0x20] sm:$0xf]
  %v28 = vld [vmem:[%s1 + $0x24] sm:$0xf]
  %v29 = vld [vmem:[%s1 + $0x28] sm:$0xf]
  %v30 = vld [vmem:[%s1 + $0x2c] sm:$0xf]
  %v31 = vld [vmem:[%s1 + $0x30] sm:$0xf]
  %v32 = vld [vmem:[%s1 + $0x34] sm:$0xf]
  %v33 = vld [vmem:[%s1 + $0x38] sm:$0xf]
  %v34 = vld [vmem:[%s1 + $0x3c] sm:$0xf]
  %v35 = vld [vmem:[%s2] sm:$0x1]
  %v37 = vlaneseq
  %v38 = vshrl.u32 %v37, 7
  %v39 = vsub.s32 0, %v38
  %v40 = vrot.slane %v35, %v39
  %v46 = vunpack.c.l.b16 %v15
  %v47 = vunpack.c.l.b16 %v16
  %v48 = vunpack.c.l.b16 %v17
  %v49 = vunpack.c.l.b16 %v18
  %v50 = vpack.c.b16 %v47, %v46
  %v51 = vpack.c.b16 %v49, %v48
  %v70 = vunpack.c.l.b16 %v19
  %v71 = vunpack.c.l.b16 %v20
  %v72 = vunpack.c.l.b16 %v21
  %v73 = vunpack.c.l.b16 %v22
  %v74 = vunpack.c.l.b16 %v23
  %v75 = vunpack.c.l.b16 %v24
  %v76 = vunpack.c.l.b16 %v25
  %v77 = vunpack.c.l.b16 %v26
  %v78 = vunpack.c.l.b16 %v27
  %v79 = vunpack.c.l.b16 %v28
  %v80 = vunpack.c.l.b16 %v29
  %v81 = vunpack.c.l.b16 %v30
  %v82 = vunpack.c.l.b16 %v31
  %v83 = vunpack.c.l.b16 %v32
  %v84 = vunpack.c.l.b16 %v33
  %v85 = vunpack.c.l.b16 %v34
  %v86 = vpack.c.b16 %v71, %v70
  %v87 = vpack.c.b16 %v73, %v72
  %v88 = vpack.c.b16 %v75, %v74
  %v89 = vpack.c.b16 %v77, %v76
  %v90 = vpack.c.b16 %v79, %v78
  %v91 = vpack.c.b16 %v81, %v80
  %v92 = vpack.c.b16 %v83, %v82
  %v93 = vpack.c.b16 %v85, %v84
  %102 = vmatprep.subr.bf16.mxu0 0
  %103 = vmatpush1.bf16.msra.mxu0 %v86
  %104 = vmatprep.subr.bf16.mxu0 0
  %105 = vmatpush1.bf16.msra.mxu0 %v87
  %106 = vmatprep.subr.bf16.mxu0 0
  %107 = vmatpush1.bf16.msra.mxu0 %v88
  %108 = vmatprep.subr.bf16.mxu0 0
  %109 = vmatpush1.bf16.msra.mxu0 %v89
  %110 = vmatprep.subr.bf16.mxu0 0
  %111 = vmatpush1.bf16.msra.mxu0 %v90
  %112 = vmatprep.subr.bf16.mxu0 0
  %113 = vmatpush1.bf16.msra.mxu0 %v91
  %114 = vmatprep.subr.bf16.mxu0 0
  %115 = vmatpush1.bf16.msra.mxu0 %v92
  %116 = vmatprep.subr.bf16.mxu0 0
  %117 = vmatpush1.bf16.msra.mxu0 %v93
  %118 = vmatprep.subr.bf16.mxu0 0
  %119 = vmatpush1.bf16.msra.mxu0 0
  %120 = vmatprep.subr.bf16.mxu0 0
  %121 = vmatpush1.bf16.msra.mxu0 0
  %122 = vmatprep.subr.bf16.mxu0 0
  %123 = vmatpush1.bf16.msra.mxu0 0
  %124 = vmatprep.subr.bf16.mxu0 0
  %125 = vmatpush1.bf16.msra.mxu0 0
  %126 = vmatprep.subr.bf16.mxu0 0
  %127 = vmatpush1.bf16.msra.mxu0 0
  %128 = vmatprep.subr.bf16.mxu0 0
  %129 = vmatpush1.bf16.msra.mxu0 0
  %130 = vmatprep.subr.bf16.mxu0 0
  %131 = vmatpush1.bf16.msra.mxu0 0
  %132 = vmatprep.subr.bf16.mxu0 0
  %133 = vmatpush1.bf16.msra.mxu0 0
  %134 = vmatprep.mubr.bf16.mxu0 0
  %135 = vmatmul.mubr.bf16.gmra.mrb[0].mxu0 %v50
  %v136 = vpop.f32.mrb[0].mxu0
  %v137 = vadd.f32 %v40, %v136
  %v138 = vpop.f32.mrb[0].mxu0
  %v139 = vpop.f32.mrb[0].mxu0
  %v140 = vadd.f32 %v40, %v139
  %v141 = vpop.f32.mrb[0].mxu0
  %142 = vmatprep.mubr.bf16.mxu0 0
  %143 = vmatmul.mubr.bf16.gmra.mrb[0].mxu0 %v51
  %v144 = vpop.f32.mrb[0].mxu0
  %v145 = vadd.f32 %v40, %v144
  %v146 = vpop.f32.mrb[0].mxu0
  %v147 = vpop.f32.mrb[0].mxu0
  %v148 = vadd.f32 %v40, %v147
  %v149 = vpop.f32.mrb[0].mxu0
  %150 = vdwg.mxu0
  %vm151 = vcmp.ge.f32.partialorder %v137, 0.0
  %vm152 = vcmp.ge.f32.partialorder %v140, 0.0
  %vm153 = vcmp.ge.f32.partialorder %v145, 0.0
  %vm154 = vcmp.ge.f32.partialorder %v148, 0.0
  %v155 = vmul.f32 %v137, 0.01
  %v156 = vmul.f32 %v140, 0.01
  %v157 = vmul.f32 %v145, 0.01
  %v158 = vmul.f32 %v148, 0.01
  %v159 = vsel %vm151, %v137, %v155
  %v160 = vsel %vm152, %v140, %v156
  %v161 = vsel %vm153, %v145, %v157
  %v162 = vsel %vm154, %v148, %v158
  %v163 = vpack.c.bf16 %v160, %v159
  %v164 = vpack.c.bf16 %v162, %v161
  %v167 = vunpack.c.l.b16 %v163
  %v168 = vunpack.c.h.b16 %v163
  %v169 = vunpack.c.l.b16 %v164
  %v170 = vunpack.c.h.b16 %v164
  %v171 = vpack.c.b16 %v167, %v167
  %v172 = vpack.c.b16 %v168, %v168
  %v173 = vpack.c.b16 %v169, %v169
  %v174 = vpack.c.b16 %v170, %v170
  %vm179 = vcmask 125952
  %180 = vst.msk [vmem:[%s3] sm:$0xf] %vm179, %v171
  %181 = vst.msk [vmem:[%s3 + $0x4] sm:$0xf] %vm179, %v172
  %182 = vst.msk [vmem:[%s3 + $0x8] sm:$0xf] %vm179, %v173
  %183 = vst.msk [vmem:[%s3 + $0xc] sm:$0xf] %vm179, %v174
  // Predicated region
  $region14: #{forward.7} parent=0 // pred_check
    _
  $region15: #{forward.7} parent=0 // pred_check_branch
    %185 = sbr.rel (0) target = $region17
  $region16: #{forward.7} parent=0 // pred_region
    _
  $region17: #{forward.7} parent=0 // pred_fallthru
    _
  // Predicated region
  $region18: #{forward.7} parent=0 // pred_check
    _
  $region19: #{forward.7} parent=0 // pred_check_branch
    %187 = sbr.rel (0) target = $region21
  $region20: #{forward.7} parent=0 // pred_region
    _
  $region21: #{forward.7} parent=0 // pred_fallthru
    _

// kernel: forward.8
$region0: #{forward.8}
  #allocation0 [shape = 'u32[]', space=smem, size = 0x4, offset = 0x4, fixed_abs, tag = 'smem constant byte address 0x4 - core index']
  #allocation1 [shape = 'u32[144,128]{1,0:T(1,128)}', space=vmem, size = 0x12000, scoped, tag = 'internal scratch']
  %s0 = inlined_call_operand.vmem [shape: bf16[8,256], index: 0, kind: input, shape index: {}]
  %s1 = inlined_call_operand.vmem [shape: bf16[256,32], index: 1, kind: input, shape index: {}]
  %s2 = inlined_call_operand.vmem [shape: f32[1,32], index: 2, kind: input, shape index: {}]
  %s3 = inlined_call_operand.vmem [shape: bf16[8,32], index: 3, kind: output, shape index: {}]
  %s4 = sld [smem:[#allocation0]]
  $region22: #{forward.8} parent=0
    _
  %s6 = ssub.s32 1, %s4
  %s7 = scalar_select 0, %s6, %s4
  // Predicated region
  $region2: #{forward.8} parent=0 // pred_check
    _
  $region3: #{forward.8} parent=0 // pred_check_branch
    %9 = sbr.rel (0) target = $region5
  $region4: #{forward.8} parent=0 // pred_region
    _
  $region5: #{forward.8} parent=0 // pred_fallthru
    _
  // Predicated region
  $region6: #{forward.8} parent=0 // pred_check
    _
  $region7: #{forward.8} parent=0 // pred_check_branch
    %11 = sbr.rel (0) target = $region9
  $region8: #{forward.8} parent=0 // pred_region
    _
  $region9: #{forward.8} parent=0 // pred_fallthru
    _
  // Predicated region
  $region10: #{forward.8} parent=0 // pred_check
    _
  $region11: #{forward.8} parent=0 // pred_check_branch
    %13 = sbr.rel (0) target = $region13
  $region12: #{forward.8} parent=0 // pred_region
    _
  $region13: #{forward.8} parent=0 // pred_fallthru
    _
  %v15 = vld [vmem:[%s0] sm:$0xff]
  %v16 = vld [vmem:[%s1] sm:$0xf]
  %v17 = vld [vmem:[%s1 + $0x4] sm:$0xf]
  %v18 = vld [vmem:[%s1 + $0x8] sm:$0xf]
  %v19 = vld [vmem:[%s1 + $0xc] sm:$0xf]
  %v20 = vld [vmem:[%s1 + $0x10] sm:$0xf]
  %v21 = vld [vmem:[%s1 + $0x14] sm:$0xf]
  %v22 = vld [vmem:[%s1 + $0x18] sm:$0xf]
  %v23 = vld [vmem:[%s1 + $0x1c] sm:$0xf]
  %v24 = vld [vmem:[%s1 + $0x20] sm:$0xf]
  %v25 = vld [vmem:[%s1 + $0x24] sm:$0xf]
  %v26 = vld [vmem:[%s1 + $0x28] sm:$0xf]
  %v27 = vld [vmem:[%s1 + $0x2c] sm:$0xf]
  %v28 = vld [vmem:[%s1 + $0x30] sm:$0xf]
  %v29 = vld [vmem:[%s1 + $0x34] sm:$0xf]
  %v30 = vld [vmem:[%s1 + $0x38] sm:$0xf]
  %v31 = vld [vmem:[%s1 + $0x3c] sm:$0xf]
  %v32 = vld [vmem:[%s1 + $0x40] sm:$0xf]
  %v33 = vld [vmem:[%s1 + $0x44] sm:$0xf]
  %v34 = vld [vmem:[%s1 + $0x48] sm:$0xf]
  %v35 = vld [vmem:[%s1 + $0x4c] sm:$0xf]
  %v36 = vld [vmem:[%s1 + $0x50] sm:$0xf]
  %v37 = vld [vmem:[%s1 + $0x54] sm:$0xf]
  %v38 = vld [vmem:[%s1 + $0x58] sm:$0xf]
  %v39 = vld [vmem:[%s1 + $0x5c] sm:$0xf]
  %v40 = vld [vmem:[%s1 + $0x60] sm:$0xf]
  %v41 = vld [vmem:[%s1 + $0x64] sm:$0xf]
  %v42 = vld [vmem:[%s1 + $0x68] sm:$0xf]
  %v43 = vld [vmem:[%s1 + $0x6c] sm:$0xf]
  %v44 = vld [vmem:[%s1 + $0x70] sm:$0xf]
  %v45 = vld [vmem:[%s1 + $0x74] sm:$0xf]
  %v46 = vld [vmem:[%s1 + $0x78] sm:$0xf]
  %v47 = vld [vmem:[%s1 + $0x7c] sm:$0xf]
  %v48 = vld [vmem:[%s2] sm:$0x1]
  %v50 = vlaneseq
  %v51 = vshrl.u32 %v50, 7
  %v52 = vsub.s32 0, %v51
  %v53 = vrot.slane %v48, %v52
  %v56 = vunpack.c.l.b16 %v15
  %v57 = vunpack.c.h.b16 %v15
  %v58 = vpack.c.b16 %v56, %v56
  %v59 = vpack.c.b16 %v57, %v57
  %v94 = vunpack.c.l.b16 %v16
  %v95 = vunpack.c.l.b16 %v17
  %v96 = vunpack.c.l.b16 %v18
  %v97 = vunpack.c.l.b16 %v19
  %v98 = vunpack.c.l.b16 %v20
  %v99 = vunpack.c.l.b16 %v21
  %v100 = vunpack.c.l.b16 %v22
  %v101 = vunpack.c.l.b16 %v23
  %v102 = vunpack.c.l.b16 %v24
  %v103 = vunpack.c.l.b16 %v25
  %v104 = vunpack.c.l.b16 %v26
  %v105 = vunpack.c.l.b16 %v27
  %v106 = vunpack.c.l.b16 %v28
  %v107 = vunpack.c.l.b16 %v29
  %v108 = vunpack.c.l.b16 %v30
  %v109 = vunpack.c.l.b16 %v31
  %v110 = vunpack.c.l.b16 %v32
  %v111 = vunpack.c.l.b16 %v33
  %v112 = vunpack.c.l.b16 %v34
  %v113 = vunpack.c.l.b16 %v35
  %v114 = vunpack.c.l.b16 %v36
  %v115 = vunpack.c.l.b16 %v37
  %v116 = vunpack.c.l.b16 %v38
  %v117 = vunpack.c.l.b16 %v39
  %v118 = vunpack.c.l.b16 %v40
  %v119 = vunpack.c.l.b16 %v41
  %v120 = vunpack.c.l.b16 %v42
  %v121 = vunpack.c.l.b16 %v43
  %v122 = vunpack.c.l.b16 %v44
  %v123 = vunpack.c.l.b16 %v45
  %v124 = vunpack.c.l.b16 %v46
  %v125 = vunpack.c.l.b16 %v47
  %v126 = vpack.c.b16 %v95, %v94
  %v127 = vpack.c.b16 %v97, %v96
  %v128 = vpack.c.b16 %v99, %v98
  %v129 = vpack.c.b16 %v101, %v100
  %v130 = vpack.c.b16 %v103, %v102
  %v131 = vpack.c.b16 %v105, %v104
  %v132 = vpack.c.b16 %v107, %v106
  %v133 = vpack.c.b16 %v109, %v108
  %v134 = vpack.c.b16 %v111, %v110
  %v135 = vpack.c.b16 %v113, %v112
  %v136 = vpack.c.b16 %v115, %v114
  %v137 = vpack.c.b16 %v117, %v116
  %v138 = vpack.c.b16 %v119, %v118
  %v139 = vpack.c.b16 %v121, %v120
  %v140 = vpack.c.b16 %v123, %v122
  %v141 = vpack.c.b16 %v125, %v124
  %158 = vmatprep.subr.bf16.mxu0 0
  %159 = vmatpush1.bf16.msra.mxu0 %v126
  %160 = vmatprep.subr.bf16.mxu0 0
  %161 = vmatpush1.bf16.msra.mxu0 %v127
  %162 = vmatprep.subr.bf16.mxu0 0
  %163 = vmatpush1.bf16.msra.mxu0 %v128
  %164 = vmatprep.subr.bf16.mxu0 0
  %165 = vmatpush1.bf16.msra.mxu0 %v129
  %166 = vmatprep.subr.bf16.mxu0 0
  %167 = vmatpush1.bf16.msra.mxu0 %v130
  %168 = vmatprep.subr.bf16.mxu0 0
  %169 = vmatpush1.bf16.msra.mxu0 %v131
  %170 = vmatprep.subr.bf16.mxu0 0
  %171 = vmatpush1.bf16.msra.mxu0 %v132
  %172 = vmatprep.subr.bf16.mxu0 0
  %173 = vmatpush1.bf16.msra.mxu0 %v133
  %174 = vmatprep.subr.bf16.mxu0 0
  %175 = vmatpush1.bf16.msra.mxu0 %v134
  %176 = vmatprep.subr.bf16.mxu0 0
  %177 = vmatpush1.bf16.msra.mxu0 %v135
  %178 = vmatprep.subr.bf16.mxu0 0
  %179 = vmatpush1.bf16.msra.mxu0 %v136
  %180 = vmatprep.subr.bf16.mxu0 0
  %181 = vmatpush1.bf16.msra.mxu0 %v137
  %182 = vmatprep.subr.bf16.mxu0 0
  %183 = vmatpush1.bf16.msra.mxu0 %v138
  %184 = vmatprep.subr.bf16.mxu0 0
  %185 = vmatpush1.bf16.msra.mxu0 %v139
  %186 = vmatprep.subr.bf16.mxu0 0
  %187 = vmatpush1.bf16.msra.mxu0 %v140
  %188 = vmatprep.subr.bf16.mxu0 0
  %189 = vmatpush1.bf16.msra.mxu0 %v141
  %190 = vmatprep.mubr.bf16.mxu0 %v59
  %191 = vmatmul.mubr.bf16.gmra.mrb[0].mxu0 %v58
  %v192 = vpop.f32.mrb[0].mxu0
  %v193 = vadd.f32 %v53, %v192
  %v194 = vpop.f32.mrb[0].mxu0
  %v195 = vpop.f32.mrb[0].mxu0
  %v196 = vpop.f32.mrb[0].mxu0
  %197 = vdwg.mxu0
  %vm198 = vcmp.ge.f32.partialorder %v193, 0.0
  %v199 = vmul.f32 %v193, 0.01
  %v200 = vsel %vm198, %v193, %v199
  %v201 = vpack.c.bf16 %v200, %v200
  %vm202 = vcmask 257024
  %203 = vst.msk [vmem:[%s3] sm:$0xf] %vm202, %v201
  // Predicated region
  $region14: #{forward.8} parent=0 // pred_check
    _
  $region15: #{forward.8} parent=0 // pred_check_branch
    %205 = sbr.rel (0) target = $region17
  $region16: #{forward.8} parent=0 // pred_region
    _
  $region17: #{forward.8} parent=0 // pred_fallthru
    _
  // Predicated region
  $region18: #{forward.8} parent=0 // pred_check
    _
  $region19: #{forward.8} parent=0 // pred_check_branch
    %207 = sbr.rel (0) target = $region21
  $region20: #{forward.8} parent=0 // pred_region
    _
  $region21: #{forward.8} parent=0 // pred_fallthru
    _

// kernel: forward.9
$region0: #{forward.9}
  #allocation0 [shape = 'u32[]', space=smem, size = 0x4, offset = 0x4, fixed_abs, tag = 'smem constant byte address 0x4 - core index']
  #allocation1 [shape = 'u32[144,128]{1,0:T(1,128)}', space=vmem, size = 0x12000, scoped, tag = 'internal scratch']
  %s0 = inlined_call_operand.vmem [shape: bf16[2,512], index: 0, kind: input, shape index: {}]
  %s1 = inlined_call_operand.vmem [shape: bf16[512,64], index: 1, kind: input, shape index: {}]
  %s2 = inlined_call_operand.vmem [shape: f32[1,64], index: 2, kind: input, shape index: {}]
  %s3 = inlined_call_operand.vmem [shape: bf16[2,64], index: 3, kind: output, shape index: {}]
  %s4 = sld [smem:[#allocation0]]
  $region22: #{forward.9} parent=0
    _
  %s6 = ssub.s32 1, %s4
  %s7 = scalar_select 0, %s6, %s4
  // Predicated region
  $region2: #{forward.9} parent=0 // pred_check
    _
  $region3: #{forward.9} parent=0 // pred_check_branch
    %9 = sbr.rel (0) target = $region5
  $region4: #{forward.9} parent=0 // pred_region
    _
  $region5: #{forward.9} parent=0 // pred_fallthru
    _
  // Predicated region
  $region6: #{forward.9} parent=0 // pred_check
    _
  $region7: #{forward.9} parent=0 // pred_check_branch
    %11 = sbr.rel (0) target = $region9
  $region8: #{forward.9} parent=0 // pred_region
    _
  $region9: #{forward.9} parent=0 // pred_fallthru
    _
  // Predicated region
  $region10: #{forward.9} parent=0 // pred_check
    _
  $region11: #{forward.9} parent=0 // pred_check_branch
    %13 = sbr.rel (0) target = $region13
  $region12: #{forward.9} parent=0 // pred_region
    _
  $region13: #{forward.9} parent=0 // pred_fallthru
    _
  %v15 = vld [vmem:[%s0] sm:$0xf]
  %v16 = vld [vmem:[%s1] sm:$0xf]
  %v17 = vld [vmem:[%s1 + $0x4] sm:$0xf]
  %v18 = vld [vmem:[%s1 + $0x8] sm:$0xf]
  %v19 = vld [vmem:[%s1 + $0xc] sm:$0xf]
  %v20 = vld [vmem:[%s1 + $0x10] sm:$0xf]
  %v21 = vld [vmem:[%s1 + $0x14] sm:$0xf]
  %v22 = vld [vmem:[%s1 + $0x18] sm:$0xf]
  %v23 = vld [vmem:[%s1 + $0x1c] sm:$0xf]
  %v24 = vld [vmem:[%s1 + $0x20] sm:$0xf]
  %v25 = vld [vmem:[%s1 + $0x24] sm:$0xf]
  %v26 = vld [vmem:[%s1 + $0x28] sm:$0xf]
  %v27 = vld [vmem:[%s1 + $0x2c] sm:$0xf]
  %v28 = vld [vmem:[%s1 + $0x30] sm:$0xf]
  %v29 = vld [vmem:[%s1 + $0x34] sm:$0xf]
  %v30 = vld [vmem:[%s1 + $0x38] sm:$0xf]
  %v31 = vld [vmem:[%s1 + $0x3c] sm:$0xf]
  %v32 = vld [vmem:[%s1 + $0x40] sm:$0xf]
  %v33 = vld [vmem:[%s1 + $0x44] sm:$0xf]
  %v34 = vld [vmem:[%s1 + $0x48] sm:$0xf]
  %v35 = vld [vmem:[%s1 + $0x4c] sm:$0xf]
  %v36 = vld [vmem:[%s1 + $0x50] sm:$0xf]
  %v37 = vld [vmem:[%s1 + $0x54] sm:$0xf]
  %v38 = vld [vmem:[%s1 + $0x58] sm:$0xf]
  %v39 = vld [vmem:[%s1 + $0x5c] sm:$0xf]
  %v40 = vld [vmem:[%s1 + $0x60] sm:$0xf]
  %v41 = vld [vmem:[%s1 + $0x64] sm:$0xf]
  %v42 = vld [vmem:[%s1 + $0x68] sm:$0xf]
  %v43 = vld [vmem:[%s1 + $0x6c] sm:$0xf]
  %v44 = vld [vmem:[%s1 + $0x70] sm:$0xf]
  %v45 = vld [vmem:[%s1 + $0x74] sm:$0xf]
  %v46 = vld [vmem:[%s1 + $0x78] sm:$0xf]
  %v47 = vld [vmem:[%s1 + $0x7c] sm:$0xf]
  %v48 = vld [vmem:[%s1 + $0x80] sm:$0xf]
  %v49 = vld [vmem:[%s1 + $0x84] sm:$0xf]
  %v50 = vld [vmem:[%s1 + $0x88] sm:$0xf]
  %v51 = vld [vmem:[%s1 + $0x8c] sm:$0xf]
  %v52 = vld [vmem:[%s1 + $0x90] sm:$0xf]
  %v53 = vld [vmem:[%s1 + $0x94] sm:$0xf]
  %v54 = vld [vmem:[%s1 + $0x98] sm:$0xf]
  %v55 = vld [vmem:[%s1 + $0x9c] sm:$0xf]
  %v56 = vld [vmem:[%s1 + $0xa0] sm:$0xf]
  %v57 = vld [vmem:[%s1 + $0xa4] sm:$0xf]
  %v58 = vld [vmem:[%s1 + $0xa8] sm:$0xf]
  %v59 = vld [vmem:[%s1 + $0xac] sm:$0xf]
  %v60 = vld [vmem:[%s1 + $0xb0] sm:$0xf]
  %v61 = vld [vmem:[%s1 + $0xb4] sm:$0xf]
  %v62 = vld [vmem:[%s1 + $0xb8] sm:$0xf]
  %v63 = vld [vmem:[%s1 + $0xbc] sm:$0xf]
  %v64 = vld [vmem:[%s1 + $0xc0] sm:$0xf]
  %v65 = vld [vmem:[%s1 + $0xc4] sm:$0xf]
  %v66 = vld [vmem:[%s1 + $0xc8] sm:$0xf]
  %v67 = vld [vmem:[%s1 + $0xcc] sm:$0xf]
  %v68 = vld [vmem:[%s1 + $0xd0] sm:$0xf]
  %v69 = vld [vmem:[%s1 + $0xd4] sm:$0xf]
  %v70 = vld [vmem:[%s1 + $0xd8] sm:$0xf]
  %v71 = vld [vmem:[%s1 + $0xdc] sm:$0xf]
  %v72 = vld [vmem:[%s1 + $0xe0] sm:$0xf]
  %v73 = vld [vmem:[%s1 + $0xe4] sm:$0xf]
  %v74 = vld [vmem:[%s1 + $0xe8] sm:$0xf]
  %v75 = vld [vmem:[%s1 + $0xec] sm:$0xf]
  %v76 = vld [vmem:[%s1 + $0xf0] sm:$0xf]
  %v77 = vld [vmem:[%s1 + $0xf4] sm:$0xf]
  %v78 = vld [vmem:[%s1 + $0xf8] sm:$0xf]
  %v79 = vld [vmem:[%s1 + $0xfc] sm:$0xf]
  %v80 = vld [vmem:[%s2] sm:$0x1]
  %v82 = vlaneseq
  %v83 = vshrl.u32 %v82, 7
  %v84 = vsub.s32 0, %v83
  %v85 = vrot.slane %v80, %v84
  %v89 = vunpack.c.l.s4 1966171168
  %v90 = vunpack.c.0.s8 %v89
  %v91 = vlaneseq
  %v92 = vshrl.u32 %v91, 7
  %v93 = vsub.s32 %v90, %v92
  %v94 = vrot.slane %v15, %v93
  %v95 = vcombine.high %v94, %v94
  %v97 = vunpack.c.l.s4 1966171168
  %v98 = vunpack.c.0.s8 %v97
  %v99 = vlaneseq
  %v100 = vshrl.u32 %v99, 7
  %v101 = vsub.s32 %v98, %v100
  %v102 = vrot.slane %v94, %v101
  %v104 = vunpack.c.l.s4 1966171168
  %v105 = vunpack.c.0.s8 %v104
  %v106 = vlaneseq
  %v107 = vshrl.u32 %v106, 7
  %v108 = vsub.s32 %v105, %v107
  %v109 = vrot.slane %v95, %v108
  %v110 = vcombine.high %v102, %v102
  %v111 = vcombine.high %v109, %v109
  %v180 = vunpack.c.l.b16 %v16
  %v181 = vunpack.c.l.b16 %v17
  %v182 = vunpack.c.l.b16 %v18
  %v183 = vunpack.c.l.b16 %v19
  %v184 = vunpack.c.l.b16 %v20
  %v185 = vunpack.c.l.b16 %v21
  %v186 = vunpack.c.l.b16 %v22
  %v187 = vunpack.c.l.b16 %v23
  %v188 = vunpack.c.l.b16 %v24
  %v189 = vunpack.c.l.b16 %v25
  %v190 = vunpack.c.l.b16 %v26
  %v191 = vunpack.c.l.b16 %v27
  %v192 = vunpack.c.l.b16 %v28
  %v193 = vunpack.c.l.b16 %v29
  %v194 = vunpack.c.l.b16 %v30
  %v195 = vunpack.c.l.b16 %v31
  %v196 = vunpack.c.l.b16 %v32
  %v197 = vunpack.c.l.b16 %v33
  %v198 = vunpack.c.l.b16 %v34
  %v199 = vunpack.c.l.b16 %v35
  %v200 = vunpack.c.l.b16 %v36
  %v201 = vunpack.c.l.b16 %v37
  %v202 = vunpack.c.l.b16 %v38
  %v203 = vunpack.c.l.b16 %v39
  %v204 = vunpack.c.l.b16 %v40
  %v205 = vunpack.c.l.b16 %v41
  %v206 = vunpack.c.l.b16 %v42
  %v207 = vunpack.c.l.b16 %v43
  %v208 = vunpack.c.l.b16 %v44
  %v209 = vunpack.c.l.b16 %v45
  %v210 = vunpack.c.l.b16 %v46
  %v211 = vunpack.c.l.b16 %v47
  %v212 = vunpack.c.l.b16 %v48
  %v213 = vunpack.c.l.b16 %v49
  %v214 = vunpack.c.l.b16 %v50
  %v215 = vunpack.c.l.b16 %v51
  %v216 = vunpack.c.l.b16 %v52
  %v217 = vunpack.c.l.b16 %v53
  %v218 = vunpack.c.l.b16 %v54
  %v219 = vunpack.c.l.b16 %v55
  %v220 = vunpack.c.l.b16 %v56
  %v221 = vunpack.c.l.b16 %v57
  %v222 = vunpack.c.l.b16 %v58
  %v223 = vunpack.c.l.b16 %v59
  %v224 = vunpack.c.l.b16 %v60
  %v225 = vunpack.c.l.b16 %v61
  %v226 = vunpack.c.l.b16 %v62
  %v227 = vunpack.c.l.b16 %v63
  %v228 = vunpack.c.l.b16 %v64
  %v229 = vunpack.c.l.b16 %v65
  %v230 = vunpack.c.l.b16 %v66
  %v231 = vunpack.c.l.b16 %v67
  %v232 = vunpack.c.l.b16 %v68
  %v233 = vunpack.c.l.b16 %v69
  %v234 = vunpack.c.l.b16 %v70
  %v235 = vunpack.c.l.b16 %v71
  %v236 = vunpack.c.l.b16 %v72
  %v237 = vunpack.c.l.b16 %v73
  %v238 = vunpack.c.l.b16 %v74
  %v239 = vunpack.c.l.b16 %v75
  %v240 = vunpack.c.l.b16 %v76
  %v241 = vunpack.c.l.b16 %v77
  %v242 = vunpack.c.l.b16 %v78
  %v243 = vunpack.c.l.b16 %v79
  %v244 = vpack.c.b16 %v181, %v180
  %v245 = vpack.c.b16 %v183, %v182
  %v246 = vpack.c.b16 %v185, %v184
  %v247 = vpack.c.b16 %v187, %v186
  %v248 = vpack.c.b16 %v189, %v188
  %v249 = vpack.c.b16 %v191, %v190
  %v250 = vpack.c.b16 %v193, %v192
  %v251 = vpack.c.b16 %v195, %v194
  %v252 = vpack.c.b16 %v197, %v196
  %v253 = vpack.c.b16 %v199, %v198
  %v254 = vpack.c.b16 %v201, %v200
  %v255 = vpack.c.b16 %v203, %v202
  %v256 = vpack.c.b16 %v205, %v204
  %v257 = vpack.c.b16 %v207, %v206
  %v258 = vpack.c.b16 %v209, %v208
  %v259 = vpack.c.b16 %v211, %v210
  %v260 = vpack.c.b16 %v213, %v212
  %v261 = vpack.c.b16 %v215, %v214
  %v262 = vpack.c.b16 %v217, %v216
  %v263 = vpack.c.b16 %v219, %v218
  %v264 = vpack.c.b16 %v221, %v220
  %v265 = vpack.c.b16 %v223, %v222
  %v266 = vpack.c.b16 %v225, %v224
  %v267 = vpack.c.b16 %v227, %v226
  %v268 = vpack.c.b16 %v229, %v228
  %v269 = vpack.c.b16 %v231, %v230
  %v270 = vpack.c.b16 %v233, %v232
  %v271 = vpack.c.b16 %v235, %v234
  %v272 = vpack.c.b16 %v237, %v236
  %v273 = vpack.c.b16 %v239, %v238
  %v274 = vpack.c.b16 %v241, %v240
  %v275 = vpack.c.b16 %v243, %v242
  %308 = vmatprep.subr.bf16.mxu0 0
  %309 = vmatpush1.bf16.msra.mxu0 %v244
  %310 = vmatprep.subr.bf16.mxu0 0
  %311 = vmatpush1.bf16.msra.mxu0 %v245
  %312 = vmatprep.subr.bf16.mxu0 0
  %313 = vmatpush1.bf16.msra.mxu0 %v246
  %314 = vmatprep.subr.bf16.mxu0 0
  %315 = vmatpush1.bf16.msra.mxu0 %v247
  %316 = vmatprep.subr.bf16.mxu0 0
  %317 = vmatpush1.bf16.msra.mxu0 %v248
  %318 = vmatprep.subr.bf16.mxu0 0
  %319 = vmatpush1.bf16.msra.mxu0 %v249
  %320 = vmatprep.subr.bf16.mxu0 0
  %321 = vmatpush1.bf16.msra.mxu0 %v250
  %322 = vmatprep.subr.bf16.mxu0 0
  %323 = vmatpush1.bf16.msra.mxu0 %v251
  %324 = vmatprep.subr.bf16.mxu0 0
  %325 = vmatpush1.bf16.msra.mxu0 %v252
  %326 = vmatprep.subr.bf16.mxu0 0
  %327 = vmatpush1.bf16.msra.mxu0 %v253
  %328 = vmatprep.subr.bf16.mxu0 0
  %329 = vmatpush1.bf16.msra.mxu0 %v254
  %330 = vmatprep.subr.bf16.mxu0 0
  %331 = vmatpush1.bf16.msra.mxu0 %v255
  %332 = vmatprep.subr.bf16.mxu0 0
  %333 = vmatpush1.bf16.msra.mxu0 %v256
  %334 = vmatprep.subr.bf16.mxu0 0
  %335 = vmatpush1.bf16.msra.mxu0 %v257
  %336 = vmatprep.subr.bf16.mxu0 0
  %337 = vmatpush1.bf16.msra.mxu0 %v258
  %338 = vmatprep.subr.bf16.mxu0 0
  %339 = vmatpush1.bf16.msra.mxu0 %v259
  %340 = vmatprep.mubr.bf16.mxu0 %v109
  %341 = vmatmul.mubr.bf16.gmra.mrb[0].mxu0 %v102
  %v342 = vpop.f32.mrb[0].mxu0
  %v343 = vadd.f32 %v85, %v342
  %v344 = vpop.f32.mrb[0].mxu0
  %v345 = vpop.f32.mrb[0].mxu0
  %v346 = vpop.f32.mrb[0].mxu0
  %347 = vdwg.mxu0
  %348 = vmatprep.subr.bf16.mxu0 0
  %349 = vmatpush1.bf16.msra.mxu0 %v260
  %350 = vmatprep.subr.bf16.mxu0 0
  %351 = vmatpush1.bf16.msra.mxu0 %v261
  %352 = vmatprep.subr.bf16.mxu0 0
  %353 = vmatpush1.bf16.msra.mxu0 %v262
  %354 = vmatprep.subr.bf16.mxu0 0
  %355 = vmatpush1.bf16.msra.mxu0 %v263
  %356 = vmatprep.subr.bf16.mxu0 0
  %357 = vmatpush1.bf16.msra.mxu0 %v264
  %358 = vmatprep.subr.bf16.mxu0 0
  %359 = vmatpush1.bf16.msra.mxu0 %v265
  %360 = vmatprep.subr.bf16.mxu0 0
  %361 = vmatpush1.bf16.msra.mxu0 %v266
  %362 = vmatprep.subr.bf16.mxu0 0
  %363 = vmatpush1.bf16.msra.mxu0 %v267
  %364 = vmatprep.subr.bf16.mxu0 0
  %365 = vmatpush1.bf16.msra.mxu0 %v268
  %366 = vmatprep.subr.bf16.mxu0 0
  %367 = vmatpush1.bf16.msra.mxu0 %v269
  %368 = vmatprep.subr.bf16.mxu0 0
  %369 = vmatpush1.bf16.msra.mxu0 %v270
  %370 = vmatprep.subr.bf16.mxu0 0
  %371 = vmatpush1.bf16.msra.mxu0 %v271
  %372 = vmatprep.subr.bf16.mxu0 0
  %373 = vmatpush1.bf16.msra.mxu0 %v272
  %374 = vmatprep.subr.bf16.mxu0 0
  %375 = vmatpush1.bf16.msra.mxu0 %v273
  %376 = vmatprep.subr.bf16.mxu0 0
  %377 = vmatpush1.bf16.msra.mxu0 %v274
  %378 = vmatprep.subr.bf16.mxu0 0
  %379 = vmatpush1.bf16.msra.mxu0 %v275
  %380 = vmatprep.mubr.bf16.mxu0 %v111
  %381 = vmatmul.mubr.bf16.gmra.mrb[0].mxu0 %v110
  %v382 = vpop.f32.mrb[0].mxu0
  %v383 = vadd.f32 %v343, %v382
  %v384 = vpop.f32.mrb[0].mxu0
  %v385 = vpop.f32.mrb[0].mxu0
  %v386 = vpop.f32.mrb[0].mxu0
  %387 = vdwg.mxu0
  %vm388 = vcmp.ge.f32.partialorder %v383, 0.0
  %v389 = vmul.f32 %v383, 0.01
  %v390 = vsel %vm388, %v383, %v389
  %v391 = vpack.c.bf16 %v390, %v390
  %vm392 = vcmask 516096
  %393 = vst.msk [vmem:[%s3] sm:$0x1] %vm392, %v391
  // Predicated region
  $region14: #{forward.9} parent=0 // pred_check
    _
  $region15: #{forward.9} parent=0 // pred_check_branch
    %395 = sbr.rel (0) target = $region17
  $region16: #{forward.9} parent=0 // pred_region
    _
  $region17: #{forward.9} parent=0 // pred_fallthru
    _
  // Predicated region
  $region18: #{forward.9} parent=0 // pred_check
    _
  $region19: #{forward.9} parent=0 // pred_check_branch
    %397 = sbr.rel (0) target = $region21
  $region20: #{forward.9} parent=0 // pred_region
    _
  $region21: #{forward.9} parent=0 // pred_fallthru
    _

// kernel: forward.11
$region0: #{forward.11}
  #allocation0 [shape = 'u32[]', space=smem, size = 0x4, offset = 0x4, fixed_abs, tag = 'smem constant byte address 0x4 - core index']
  #allocation1 [shape = 'u32[144,128]{1,0:T(1,128)}', space=vmem, size = 0x12000, scoped, tag = 'internal scratch']
  %s0 = inlined_call_operand.vmem [shape: bf16[2,64], index: 0, kind: input, shape index: {}]
  %s1 = inlined_call_operand.vmem [shape: bf16[64,5], index: 1, kind: input, shape index: {}]
  %s2 = inlined_call_operand.vmem [shape: f32[1,5], index: 2, kind: input, shape index: {}]
  %s3 = inlined_call_operand.hbm [shape: f32[2,5], index: 3, kind: output, shape index: {}]
  %s4 = sld [smem:[#allocation0]]
  $region22: #{forward.11} parent=0
    _
  %s6 = ssub.s32 1, %s4
  %s7 = scalar_select 0, %s6, %s4
  $region1: #{forward.11} parent=0
    #allocation2 [shape = 'u8[1024]{0}', space=vmem, size = 0x400, scoped, tag = 'output window, operand 0, single buffered']
    #allocation3 [shape = 's32[1]{0}', space=sflag, size = 0x4, scoped, tag = 'scoped memory for forward.11']
    %8 = vsyncpa [#allocation3], 0
    // Predicated region
    $region2: #{forward.11} parent=1 // pred_check
      _
    $region3: #{forward.11} parent=1 // pred_check_branch
      %10 = sbr.rel (0) target = $region5
    $region4: #{forward.11} parent=1 // pred_region
      _
    $region5: #{forward.11} parent=1 // pred_fallthru
      _
    // Predicated region
    $region6: #{forward.11} parent=1 // pred_check
      _
    $region7: #{forward.11} parent=1 // pred_check_branch
      %12 = sbr.rel (0) target = $region9
    $region8: #{forward.11} parent=1 // pred_region
      _
    $region9: #{forward.11} parent=1 // pred_fallthru
      _
    // Predicated region
    $region10: #{forward.11} parent=1 // pred_check
      _
    $region11: #{forward.11} parent=1 // pred_check_branch
      %14 = sbr.rel (0) target = $region13
    $region12: #{forward.11} parent=1 // pred_region
      _
    $region13: #{forward.11} parent=1 // pred_fallthru
      _
    %v16 = vld [vmem:[%s0] sm:$0x1]
    %v17 = vld [vmem:[%s1] sm:$0xf]
    %v18 = vld [vmem:[%s1 + $0x4] sm:$0xf]
    %v19 = vld [vmem:[%s1 + $0x8] sm:$0xf]
    %v20 = vld [vmem:[%s1 + $0xc] sm:$0xf]
    %v21 = vld [vmem:[%s1 + $0x10] sm:$0xf]
    %v22 = vld [vmem:[%s1 + $0x14] sm:$0xf]
    %v23 = vld [vmem:[%s1 + $0x18] sm:$0xf]
    %v24 = vld [vmem:[%s1 + $0x1c] sm:$0xf]
    %v25 = vld [vmem:[%s2] sm:$0x1]
    %v27 = vlaneseq
    %v28 = vshrl.u32 %v27, 7
    %v29 = vsub.s32 0, %v28
    %v30 = vrot.slane %v25, %v29
    %v40 = vunpack.c.l.b16 %v17
    %v41 = vunpack.c.l.b16 %v18
    %v42 = vunpack.c.l.b16 %v19
    %v43 = vunpack.c.l.b16 %v20
    %v44 = vunpack.c.l.b16 %v21
    %v45 = vunpack.c.l.b16 %v22
    %v46 = vunpack.c.l.b16 %v23
    %v47 = vunpack.c.l.b16 %v24
    %v48 = vpack.c.b16 %v41, %v40
    %v49 = vpack.c.b16 %v43, %v42
    %v50 = vpack.c.b16 %v45, %v44
    %v51 = vpack.c.b16 %v47, %v46
    %vm56 = vcmask 523264
    %v58 = vsel %vm56, %v16, 0
    %60 = vmatprep.subr.bf16.mxu0 0
    %61 = vmatpush1.bf16.msra.mxu0 %v48
    %62 = vmatprep.subr.bf16.mxu0 0
    %63 = vmatpush1.bf16.msra.mxu0 %v49
    %64 = vmatprep.subr.bf16.mxu0 0
    %65 = vmatpush1.bf16.msra.mxu0 %v50
    %66 = vmatprep.subr.bf16.mxu0 0
    %67 = vmatpush1.bf16.msra.mxu0 %v51
    %68 = vmatprep.subr.bf16.mxu0 0
    %69 = vmatpush1.bf16.msra.mxu0 0
    %70 = vmatprep.subr.bf16.mxu0 0
    %71 = vmatpush1.bf16.msra.mxu0 0
    %72 = vmatprep.subr.bf16.mxu0 0
    %73 = vmatpush1.bf16.msra.mxu0 0
    %74 = vmatprep.subr.bf16.mxu0 0
    %75 = vmatpush1.bf16.msra.mxu0 0
    %76 = vmatprep.subr.bf16.mxu0 0
    %77 = vmatpush1.bf16.msra.mxu0 0
    %78 = vmatprep.subr.bf16.mxu0 0
    %79 = vmatpush1.bf16.msra.mxu0 0
    %80 = vmatprep.subr.bf16.mxu0 0
    %81 = vmatpush1.bf16.msra.mxu0 0
    %82 = vmatprep.subr.bf16.mxu0 0
    %83 = vmatpush1.bf16.msra.mxu0 0
    %84 = vmatprep.subr.bf16.mxu0 0
    %85 = vmatpush1.bf16.msra.mxu0 0
    %86 = vmatprep.subr.bf16.mxu0 0
    %87 = vmatpush1.bf16.msra.mxu0 0
    %88 = vmatprep.subr.bf16.mxu0 0
    %89 = vmatpush1.bf16.msra.mxu0 0
    %90 = vmatprep.subr.bf16.mxu0 0
    %91 = vmatpush1.bf16.msra.mxu0 0
    %92 = vmatprep.mubr.bf16.mxu0 0
    %93 = vmatmul.mubr.bf16.gmra.mrb[0].mxu0 %v58
    %v94 = vpop.f32.mrb[0].mxu0
    %v95 = vadd.f32 %v30, %v94
    %v96 = vpop.f32.mrb[0].mxu0
    %v97 = vpop.f32.mrb[0].mxu0
    %v98 = vpop.f32.mrb[0].mxu0
    %99 = vdwg.mxu0
    %vm100 = vcmask 33792
    %101 = vst.msk [vmem:[#allocation2] sm:$0x3] %vm100, %v95
    // Predicated region
    $region14: #{forward.11} parent=1 // pred_check
      _
    $region15: #{forward.11} parent=1 // pred_check_branch
      %103 = sbr.rel (0) target = $region17
    $region16: #{forward.11} parent=1 // pred_region
      %s105 = ssub.s32 32, 32
      %106 = vsyncadd [#allocation3], %s105
      %s108 = sshll.u32 [#allocation2], 4
      %s109 = int_to_ptr.vmem [resolvable:$true] %s108
      %111 = dma.vmem_to_hbm [thread:$0]  %s109, 32, %s3, [#allocation3]
    $region17: #{forward.11} parent=1 // pred_fallthru
      _
    // Predicated region
    $region18: #{forward.11} parent=1 // pred_check
      _
    $region19: #{forward.11} parent=1 // pred_check_branch
      %113 = sbr.rel (0) target = $region21
    $region20: #{forward.11} parent=1 // pred_region
      %114 = dma.done [#allocation3], 32
    $region21: #{forward.11} parent=1 // pred_fallthru
      _
    %115 = vsyncpa [#allocation3], 1

// kernel: forward.10
$region0: #{forward.10}
  #allocation0 [shape = 'u32[]', space=smem, size = 0x4, offset = 0x4, fixed_abs, tag = 'smem constant byte address 0x4 - core index']
  #allocation1 [shape = 'u32[144,128]{1,0:T(1,128)}', space=vmem, size = 0x12000, scoped, tag = 'internal scratch']
  #allocation2 [shape = 'f32[1,1]{1,0:T(1,128)S(1)}', space=vmem, size = 0x200, scoped, tag = 'scoped memory for forward.10']
  %s0 = inlined_call_operand.vmem [shape: bf16[2,576], index: 0, kind: input, shape index: {}]
  %s1 = inlined_call_operand.vmem [shape: bf16[576,1], index: 1, kind: input, shape index: {}]
  %s2 = inlined_call_operand.<no memory space> [shape: f32[1,1], index: 2, kind: input, shape index: {}]
  %s3 = inlined_call_operand.vmem [shape: f32[2,1], index: 3, kind: output, shape index: {}]
  %s4 = sld [smem:[#allocation0]]
  $region22: #{forward.10} parent=0
    _
  %s6 = ssub.s32 1, %s4
  %s7 = scalar_select 0, %s6, %s4
  %v8 = vstv %s2
  %9 = vst [vmem:[#allocation2] sm:$0x1] %v8
  // Predicated region
  $region2: #{forward.10} parent=0 // pred_check
    _
  $region3: #{forward.10} parent=0 // pred_check_branch
    %11 = sbr.rel (0) target = $region5
  $region4: #{forward.10} parent=0 // pred_region
    _
  $region5: #{forward.10} parent=0 // pred_fallthru
    _
  // Predicated region
  $region6: #{forward.10} parent=0 // pred_check
    _
  $region7: #{forward.10} parent=0 // pred_check_branch
    %13 = sbr.rel (0) target = $region9
  $region8: #{forward.10} parent=0 // pred_region
    _
  $region9: #{forward.10} parent=0 // pred_fallthru
    _
  // Predicated region
  $region10: #{forward.10} parent=0 // pred_check
    _
  $region11: #{forward.10} parent=0 // pred_check_branch
    %15 = sbr.rel (0) target = $region13
  $region12: #{forward.10} parent=0 // pred_region
    _
  $region13: #{forward.10} parent=0 // pred_fallthru
    _
  %v17 = vld [vmem:[%s0] sm:$0x1f]
  %v18 = vld [vmem:[%s1] sm:$0xf]
  %v19 = vld [vmem:[%s1 + $0x4] sm:$0xf]
  %v20 = vld [vmem:[%s1 + $0x8] sm:$0xf]
  %v21 = vld [vmem:[%s1 + $0xc] sm:$0xf]
  %v22 = vld [vmem:[%s1 + $0x10] sm:$0xf]
  %v23 = vld [vmem:[%s1 + $0x14] sm:$0xf]
  %v24 = vld [vmem:[%s1 + $0x18] sm:$0xf]
  %v25 = vld [vmem:[%s1 + $0x1c] sm:$0xf]
  %v26 = vld [vmem:[%s1 + $0x20] sm:$0xf]
  %v27 = vld [vmem:[%s1 + $0x24] sm:$0xf]
  %v28 = vld [vmem:[%s1 + $0x28] sm:$0xf]
  %v29 = vld [vmem:[%s1 + $0x2c] sm:$0xf]
  %v30 = vld [vmem:[%s1 + $0x30] sm:$0xf]
  %v31 = vld [vmem:[%s1 + $0x34] sm:$0xf]
  %v32 = vld [vmem:[%s1 + $0x38] sm:$0xf]
  %v33 = vld [vmem:[%s1 + $0x3c] sm:$0xf]
  %v34 = vld [vmem:[%s1 + $0x40] sm:$0xf]
  %v35 = vld [vmem:[%s1 + $0x44] sm:$0xf]
  %v36 = vld [vmem:[%s1 + $0x48] sm:$0xf]
  %v37 = vld [vmem:[%s1 + $0x4c] sm:$0xf]
  %v38 = vld [vmem:[%s1 + $0x50] sm:$0xf]
  %v39 = vld [vmem:[%s1 + $0x54] sm:$0xf]
  %v40 = vld [vmem:[%s1 + $0x58] sm:$0xf]
  %v41 = vld [vmem:[%s1 + $0x5c] sm:$0xf]
  %v42 = vld [vmem:[%s1 + $0x60] sm:$0xf]
  %v43 = vld [vmem:[%s1 + $0x64] sm:$0xf]
  %v44 = vld [vmem:[%s1 + $0x68] sm:$0xf]
  %v45 = vld [vmem:[%s1 + $0x6c] sm:$0xf]
  %v46 = vld [vmem:[%s1 + $0x70] sm:$0xf]
  %v47 = vld [vmem:[%s1 + $0x74] sm:$0xf]
  %v48 = vld [vmem:[%s1 + $0x78] sm:$0xf]
  %v49 = vld [vmem:[%s1 + $0x7c] sm:$0xf]
  %v50 = vld [vmem:[%s1 + $0x80] sm:$0xf]
  %v51 = vld [vmem:[%s1 + $0x84] sm:$0xf]
  %v52 = vld [vmem:[%s1 + $0x88] sm:$0xf]
  %v53 = vld [vmem:[%s1 + $0x8c] sm:$0xf]
  %v54 = vld [vmem:[%s1 + $0x90] sm:$0xf]
  %v55 = vld [vmem:[%s1 + $0x94] sm:$0xf]
  %v56 = vld [vmem:[%s1 + $0x98] sm:$0xf]
  %v57 = vld [vmem:[%s1 + $0x9c] sm:$0xf]
  %v58 = vld [vmem:[%s1 + $0xa0] sm:$0xf]
  %v59 = vld [vmem:[%s1 + $0xa4] sm:$0xf]
  %v60 = vld [vmem:[%s1 + $0xa8] sm:$0xf]
  %v61 = vld [vmem:[%s1 + $0xac] sm:$0xf]
  %v62 = vld [vmem:[%s1 + $0xb0] sm:$0xf]
  %v63 = vld [vmem:[%s1 + $0xb4] sm:$0xf]
  %v64 = vld [vmem:[%s1 + $0xb8] sm:$0xf]
  %v65 = vld [vmem:[%s1 + $0xbc] sm:$0xf]
  %v66 = vld [vmem:[%s1 + $0xc0] sm:$0xf]
  %v67 = vld [vmem:[%s1 + $0xc4] sm:$0xf]
  %v68 = vld [vmem:[%s1 + $0xc8] sm:$0xf]
  %v69 = vld [vmem:[%s1 + $0xcc] sm:$0xf]
  %v70 = vld [vmem:[%s1 + $0xd0] sm:$0xf]
  %v71 = vld [vmem:[%s1 + $0xd4] sm:$0xf]
  %v72 = vld [vmem:[%s1 + $0xd8] sm:$0xf]
  %v73 = vld [vmem:[%s1 + $0xdc] sm:$0xf]
  %v74 = vld [vmem:[%s1 + $0xe0] sm:$0xf]
  %v75 = vld [vmem:[%s1 + $0xe4] sm:$0xf]
  %v76 = vld [vmem:[%s1 + $0xe8] sm:$0xf]
  %v77 = vld [vmem:[%s1 + $0xec] sm:$0xf]
  %v78 = vld [vmem:[%s1 + $0xf0] sm:$0xf]
  %v79 = vld [vmem:[%s1 + $0xf4] sm:$0xf]
  %v80 = vld [vmem:[%s1 + $0xf8] sm:$0xf]
  %v81 = vld [vmem:[%s1 + $0xfc] sm:$0xf]
  %v82 = vld [vmem:[%s1 + $0x100] sm:$0xf]
  %v83 = vld [vmem:[%s1 + $0x104] sm:$0xf]
  %v84 = vld [vmem:[%s1 + $0x108] sm:$0xf]
  %v85 = vld [vmem:[%s1 + $0x10c] sm:$0xf]
  %v86 = vld [vmem:[%s1 + $0x110] sm:$0xf]
  %v87 = vld [vmem:[%s1 + $0x114] sm:$0xf]
  %v88 = vld [vmem:[%s1 + $0x118] sm:$0xf]
  %v89 = vld [vmem:[%s1 + $0x11c] sm:$0xf]
  %v90 = vld [vmem:[#allocation2] sm:$0x1]
  %v92 = vlaneseq
  %v93 = vshrl.u32 %v92, 7
  %v94 = vsub.s32 0, %v93
  %v95 = vrot.slane %v90, %v94
  %v98 = vcombine.high %v17, %v17
  %v100 = vunpack.c.l.s4 1966171168
  %v101 = vunpack.c.0.s8 %v100
  %v102 = vlaneseq
  %v103 = vshrl.u32 %v102, 7
  %v104 = vsub.s32 %v101, %v103
  %v105 = vrot.slane %v17, %v104
  %v107 = vunpack.c.l.s4 1966171168
  %v108 = vunpack.c.0.s8 %v107
  %v109 = vlaneseq
  %v110 = vshrl.u32 %v109, 7
  %v111 = vsub.s32 %v108, %v110
  %v112 = vrot.slane %v98, %v111
  %v113 = vcombine.high %v105, %v105
  %v115 = vunpack.c.l.s4 1966171168
  %v116 = vunpack.c.0.s8 %v115
  %v117 = vlaneseq
  %v118 = vshrl.u32 %v117, 7
  %v119 = vsub.s32 %v116, %v118
  %v120 = vrot.slane %v105, %v119
  %v122 = vunpack.c.l.s4 1966171168
  %v123 = vunpack.c.0.s8 %v122
  %v124 = vlaneseq
  %v125 = vshrl.u32 %v124, 7
  %v126 = vsub.s32 %v123, %v125
  %v127 = vrot.slane %v112, %v126
  %v129 = vunpack.c.l.s4 1966171168
  %v130 = vunpack.c.0.s8 %v129
  %v131 = vlaneseq
  %v132 = vshrl.u32 %v131, 7
  %v133 = vsub.s32 %v130, %v132
  %v134 = vrot.slane %v113, %v133
  %v135 = vcombine.high %v120, %v120
  %v136 = vcombine.high %v134, %v134
  %v213 = vunpack.c.l.b16 %v18
  %v214 = vunpack.c.l.b16 %v19
  %v215 = vunpack.c.l.b16 %v20
  %v216 = vunpack.c.l.b16 %v21
  %v217 = vunpack.c.l.b16 %v22
  %v218 = vunpack.c.l.b16 %v23
  %v219 = vunpack.c.l.b16 %v24
  %v220 = vunpack.c.l.b16 %v25
  %v221 = vunpack.c.l.b16 %v26
  %v222 = vunpack.c.l.b16 %v27
  %v223 = vunpack.c.l.b16 %v28
  %v224 = vunpack.c.l.b16 %v29
  %v225 = vunpack.c.l.b16 %v30
  %v226 = vunpack.c.l.b16 %v31
  %v227 = vunpack.c.l.b16 %v32
  %v228 = vunpack.c.l.b16 %v33
  %v229 = vunpack.c.l.b16 %v34
  %v230 = vunpack.c.l.b16 %v35
  %v231 = vunpack.c.l.b16 %v36
  %v232 = vunpack.c.l.b16 %v37
  %v233 = vunpack.c.l.b16 %v38
  %v234 = vunpack.c.l.b16 %v39
  %v235 = vunpack.c.l.b16 %v40
  %v236 = vunpack.c.l.b16 %v41
  %v237 = vunpack.c.l.b16 %v42
  %v238 = vunpack.c.l.b16 %v43
  %v239 = vunpack.c.l.b16 %v44
  %v240 = vunpack.c.l.b16 %v45
  %v241 = vunpack.c.l.b16 %v46
  %v242 = vunpack.c.l.b16 %v47
  %v243 = vunpack.c.l.b16 %v48
  %v244 = vunpack.c.l.b16 %v49
  %v245 = vunpack.c.l.b16 %v50
  %v246 = vunpack.c.l.b16 %v51
  %v247 = vunpack.c.l.b16 %v52
  %v248 = vunpack.c.l.b16 %v53
  %v249 = vunpack.c.l.b16 %v54
  %v250 = vunpack.c.l.b16 %v55
  %v251 = vunpack.c.l.b16 %v56
  %v252 = vunpack.c.l.b16 %v57
  %v253 = vunpack.c.l.b16 %v58
  %v254 = vunpack.c.l.b16 %v59
  %v255 = vunpack.c.l.b16 %v60
  %v256 = vunpack.c.l.b16 %v61
  %v257 = vunpack.c.l.b16 %v62
  %v258 = vunpack.c.l.b16 %v63
  %v259 = vunpack.c.l.b16 %v64
  %v260 = vunpack.c.l.b16 %v65
  %v261 = vunpack.c.l.b16 %v66
  %v262 = vunpack.c.l.b16 %v67
  %v263 = vunpack.c.l.b16 %v68
  %v264 = vunpack.c.l.b16 %v69
  %v265 = vunpack.c.l.b16 %v70
  %v266 = vunpack.c.l.b16 %v71
  %v267 = vunpack.c.l.b16 %v72
  %v268 = vunpack.c.l.b16 %v73
  %v269 = vunpack.c.l.b16 %v74
  %v270 = vunpack.c.l.b16 %v75
  %v271 = vunpack.c.l.b16 %v76
  %v272 = vunpack.c.l.b16 %v77
  %v273 = vunpack.c.l.b16 %v78
  %v274 = vunpack.c.l.b16 %v79
  %v275 = vunpack.c.l.b16 %v80
  %v276 = vunpack.c.l.b16 %v81
  %v277 = vunpack.c.l.b16 %v82
  %v278 = vunpack.c.l.b16 %v83
  %v279 = vunpack.c.l.b16 %v84
  %v280 = vunpack.c.l.b16 %v85
  %v281 = vunpack.c.l.b16 %v86
  %v282 = vunpack.c.l.b16 %v87
  %v283 = vunpack.c.l.b16 %v88
  %v284 = vunpack.c.l.b16 %v89
  %v285 = vpack.c.b16 %v214, %v213
  %v286 = vpack.c.b16 %v216, %v215
  %v287 = vpack.c.b16 %v218, %v217
  %v288 = vpack.c.b16 %v220, %v219
  %v289 = vpack.c.b16 %v222, %v221
  %v290 = vpack.c.b16 %v224, %v223
  %v291 = vpack.c.b16 %v226, %v225
  %v292 = vpack.c.b16 %v228, %v227
  %v293 = vpack.c.b16 %v230, %v229
  %v294 = vpack.c.b16 %v232, %v231
  %v295 = vpack.c.b16 %v234, %v233
  %v296 = vpack.c.b16 %v236, %v235
  %v297 = vpack.c.b16 %v238, %v237
  %v298 = vpack.c.b16 %v240, %v239
  %v299 = vpack.c.b16 %v242, %v241
  %v300 = vpack.c.b16 %v244, %v243
  %v301 = vpack.c.b16 %v246, %v245
  %v302 = vpack.c.b16 %v248, %v247
  %v303 = vpack.c.b16 %v250, %v249
  %v304 = vpack.c.b16 %v252, %v251
  %v305 = vpack.c.b16 %v254, %v253
  %v306 = vpack.c.b16 %v256, %v255
  %v307 = vpack.c.b16 %v258, %v257
  %v308 = vpack.c.b16 %v260, %v259
  %v309 = vpack.c.b16 %v262, %v261
  %v310 = vpack.c.b16 %v264, %v263
  %v311 = vpack.c.b16 %v266, %v265
  %v312 = vpack.c.b16 %v268, %v267
  %v313 = vpack.c.b16 %v270, %v269
  %v314 = vpack.c.b16 %v272, %v271
  %v315 = vpack.c.b16 %v274, %v273
  %v316 = vpack.c.b16 %v276, %v275
  %v317 = vpack.c.b16 %v278, %v277
  %v318 = vpack.c.b16 %v280, %v279
  %v319 = vpack.c.b16 %v282, %v281
  %v320 = vpack.c.b16 %v284, %v283
  %vm357 = vcmask 523264
  %v359 = vsel %vm357, %v127, 0
  %361 = vmatprep.subr.bf16.mxu0 0
  %362 = vmatpush1.bf16.msra.mxu0 %v285
  %363 = vmatprep.subr.bf16.mxu0 0
  %364 = vmatpush1.bf16.msra.mxu0 %v286
  %365 = vmatprep.subr.bf16.mxu0 0
  %366 = vmatpush1.bf16.msra.mxu0 %v287
  %367 = vmatprep.subr.bf16.mxu0 0
  %368 = vmatpush1.bf16.msra.mxu0 %v288
  %369 = vmatprep.subr.bf16.mxu0 0
  %370 = vmatpush1.bf16.msra.mxu0 %v289
  %371 = vmatprep.subr.bf16.mxu0 0
  %372 = vmatpush1.bf16.msra.mxu0 %v290
  %373 = vmatprep.subr.bf16.mxu0 0
  %374 = vmatpush1.bf16.msra.mxu0 %v291
  %375 = vmatprep.subr.bf16.mxu0 0
  %376 = vmatpush1.bf16.msra.mxu0 %v292
  %377 = vmatprep.subr.bf16.mxu0 0
  %378 = vmatpush1.bf16.msra.mxu0 %v293
  %379 = vmatprep.subr.bf16.mxu0 0
  %380 = vmatpush1.bf16.msra.mxu0 %v294
  %381 = vmatprep.subr.bf16.mxu0 0
  %382 = vmatpush1.bf16.msra.mxu0 %v295
  %383 = vmatprep.subr.bf16.mxu0 0
  %384 = vmatpush1.bf16.msra.mxu0 %v296
  %385 = vmatprep.subr.bf16.mxu0 0
  %386 = vmatpush1.bf16.msra.mxu0 %v297
  %387 = vmatprep.subr.bf16.mxu0 0
  %388 = vmatpush1.bf16.msra.mxu0 %v298
  %389 = vmatprep.subr.bf16.mxu0 0
  %390 = vmatpush1.bf16.msra.mxu0 %v299
  %391 = vmatprep.subr.bf16.mxu0 0
  %392 = vmatpush1.bf16.msra.mxu0 %v300
  %393 = vmatprep.mubr.bf16.mxu0 %v134
  %394 = vmatmul.mubr.bf16.gmra.mrb[0].mxu0 %v120
  %v395 = vpop.f32.mrb[0].mxu0
  %v396 = vadd.f32 %v95, %v395
  %v397 = vpop.f32.mrb[0].mxu0
  %v398 = vpop.f32.mrb[0].mxu0
  %v399 = vpop.f32.mrb[0].mxu0
  %400 = vdwg.mxu0
  %401 = vmatprep.subr.bf16.mxu0 0
  %402 = vmatpush1.bf16.msra.mxu0 %v301
  %403 = vmatprep.subr.bf16.mxu0 0
  %404 = vmatpush1.bf16.msra.mxu0 %v302
  %405 = vmatprep.subr.bf16.mxu0 0
  %406 = vmatpush1.bf16.msra.mxu0 %v303
  %407 = vmatprep.subr.bf16.mxu0 0
  %408 = vmatpush1.bf16.msra.mxu0 %v304
  %409 = vmatprep.subr.bf16.mxu0 0
  %410 = vmatpush1.bf16.msra.mxu0 %v305
  %411 = vmatprep.subr.bf16.mxu0 0
  %412 = vmatpush1.bf16.msra.mxu0 %v306
  %413 = vmatprep.subr.bf16.mxu0 0
  %414 = vmatpush1.bf16.msra.mxu0 %v307
  %415 = vmatprep.subr.bf16.mxu0 0
  %416 = vmatpush1.bf16.msra.mxu0 %v308
  %417 = vmatprep.subr.bf16.mxu0 0
  %418 = vmatpush1.bf16.msra.mxu0 %v309
  %419 = vmatprep.subr.bf16.mxu0 0
  %420 = vmatpush1.bf16.msra.mxu0 %v310
  %421 = vmatprep.subr.bf16.mxu0 0
  %422 = vmatpush1.bf16.msra.mxu0 %v311
  %423 = vmatprep.subr.bf16.mxu0 0
  %424 = vmatpush1.bf16.msra.mxu0 %v312
  %425 = vmatprep.subr.bf16.mxu0 0
  %426 = vmatpush1.bf16.msra.mxu0 %v313
  %427 = vmatprep.subr.bf16.mxu0 0
  %428 = vmatpush1.bf16.msra.mxu0 %v314
  %429 = vmatprep.subr.bf16.mxu0 0
  %430 = vmatpush1.bf16.msra.mxu0 %v315
  %431 = vmatprep.subr.bf16.mxu0 0
  %432 = vmatpush1.bf16.msra.mxu0 %v316
  %433 = vmatprep.mubr.bf16.mxu0 %v136
  %434 = vmatmul.mubr.bf16.gmra.mrb[0].mxu0 %v135
  %v435 = vpop.f32.mrb[0].mxu0
  %v436 = vadd.f32 %v396, %v435
  %v437 = vpop.f32.mrb[0].mxu0
  %v438 = vpop.f32.mrb[0].mxu0
  %v439 = vpop.f32.mrb[0].mxu0
  %440 = vdwg.mxu0
  %441 = vmatprep.subr.bf16.mxu0 0
  %442 = vmatpush1.bf16.msra.mxu0 %v317
  %443 = vmatprep.subr.bf16.mxu0 0
  %444 = vmatpush1.bf16.msra.mxu0 %v318
  %445 = vmatprep.subr.bf16.mxu0 0
  %446 = vmatpush1.bf16.msra.mxu0 %v319
  %447 = vmatprep.subr.bf16.mxu0 0
  %448 = vmatpush1.bf16.msra.mxu0 %v320
  %449 = vmatprep.subr.bf16.mxu0 0
  %450 = vmatpush1.bf16.msra.mxu0 0
  %451 = vmatprep.subr.bf16.mxu0 0
  %452 = vmatpush1.bf16.msra.mxu0 0
  %453 = vmatprep.subr.bf16.mxu0 0
  %454 = vmatpush1.bf16.msra.mxu0 0
  %455 = vmatprep.subr.bf16.mxu0 0
  %456 = vmatpush1.bf16.msra.mxu0 0
  %457 = vmatprep.subr.bf16.mxu0 0
  %458 = vmatpush1.bf16.msra.mxu0 0
  %459 = vmatprep.subr.bf16.mxu0 0
  %460 = vmatpush1.bf16.msra.mxu0 0
  %461 = vmatprep.subr.bf16.mxu0 0
  %462 = vmatpush1.bf16.msra.mxu0 0
  %463 = vmatprep.subr.bf16.mxu0 0
  %464 = vmatpush1.bf16.msra.mxu0 0
  %465 = vmatprep.subr.bf16.mxu0 0
  %466 = vmatpush1.bf16.msra.mxu0 0
  %467 = vmatprep.subr.bf16.mxu0 0
  %468 = vmatpush1.bf16.msra.mxu0 0
  %469 = vmatprep.subr.bf16.mxu0 0
  %470 = vmatpush1.bf16.msra.mxu0 0
  %471 = vmatprep.subr.bf16.mxu0 0
  %472 = vmatpush1.bf16.msra.mxu0 0
  %473 = vmatprep.mubr.bf16.mxu0 0
  %474 = vmatmul.mubr.bf16.gmra.mrb[0].mxu0 %v359
  %v475 = vpop.f32.mrb[0].mxu0
  %v476 = vadd.f32 %v436, %v475
  %v477 = vpop.f32.mrb[0].mxu0
  %v478 = vpop.f32.mrb[0].mxu0
  %v479 = vpop.f32.mrb[0].mxu0
  %480 = vdwg.mxu0
  %vm481 = vcmask 1024
  %482 = vst.msk [vmem:[%s3] sm:$0x3] %vm481, %v476
  // Predicated region
  $region14: #{forward.10} parent=0 // pred_check
    _
  $region15: #{forward.10} parent=0 // pred_check_branch
    %484 = sbr.rel (0) target = $region17
  $region16: #{forward.10} parent=0 // pred_region
    _
  $region17: #{forward.10} parent=0 // pred_fallthru
    _
  // Predicated region
  $region18: #{forward.10} parent=0 // pred_check
    _
  $region19: #{forward.10} parent=0 // pred_check_branch
    %486 = sbr.rel (0) target = $region21
  $region20: #{forward.10} parent=0 // pred_region
    _
  $region21: #{forward.10} parent=0 // pred_fallthru
    _

</llo_original>
